<compile_context>
chip_gen: v6e
topology: v6e:2x2x1
jax: 0.10.0
libtpu: 0.0.40
codegen_flags: <defaults>
</compile_context>

<pallas_src>
import functools

import jax
import jax.numpy as jnp
from jax.experimental import pallas as pl
from jax.experimental.pallas import tpu as pltpu


def _round_up(x, m):
    return ((x + m - 1) // m) * m


# ---------------------------------------------------------------------------
# Pallas kernels
# ---------------------------------------------------------------------------
def transform_kernel(x_ref, w_ref, dinv_ref, h_ref):
    """Per-node transform + source-side normalisation:  H = dinv ⊙ (X @ W).

    grid = (node tiles,)  — computed once per layer (hoisted out of the
    aggregation reduction).  bf16 inputs, f32 accumulation, bf16 output.
    """
    xw = jnp.dot(x_ref[...], w_ref[...], preferred_element_type=jnp.float32)
    h_ref[...] = (xw * dinv_ref[...]).astype(h_ref.dtype)


def aggregate_kernel(a_ref, h_ref, dinv_ref, b_ref, o_ref, acc_ref):
    """Neighbourhood aggregation + destination norm + bias + ReLU.

        out[i] = relu( dinv[i] * sum_k A[i, k] @ H[k] + b )

    grid = (output-node tiles i -> "parallel",
            neighbour   tiles k -> "arbitrary"; f32 accumulator resident)

    A and H tiles are bf16 (A holds exact small-integer edge counts), so the
    matmul uses the bf16 MXU path with f32 accumulation.
    """
    k = pl.program_id(1)

    @pl.when(k == 0)
    def _():
        acc_ref[...] = jnp.zeros_like(acc_ref)

    acc_ref[...] += jnp.dot(a_ref[...], h_ref[...],
                            preferred_element_type=jnp.float32)

    @pl.when(k == pl.num_programs(1) - 1)
    def _():
        out = dinv_ref[...] * acc_ref[...] + b_ref[...]   # bias only once
        o_ref[...] = jnp.maximum(out, 0.0).astype(o_ref.dtype)


def pool_fc_kernel(pool_ref, h_ref, invc_ref, w_ref, b_ref, o_ref, acc_ref):
    """global_mean_pool + final Linear, tiled over the node (reduction) axis.

    pool is an exact 0/1 one-hot membership matrix (bf16); the mean's 1/count
    factor is applied as an exact f32 multiply in the epilogue.
    """
    k = pl.program_id(0)

    @pl.when(k == 0)
    def _():
        acc_ref[...] = jnp.zeros_like(acc_ref)

    acc_ref[...] += jnp.dot(pool_ref[...], h_ref[...],
                            preferred_element_type=jnp.float32)

    @pl.when(k == pl.num_programs(0) - 1)
    def _():
        pooled = acc_ref[...] * invc_ref[...]
        o_ref[...] = jnp.dot(pooled, w_ref[...],
                             preferred_element_type=jnp.float32) + b_ref[...]


# ---------------------------------------------------------------------------
# pallas_call wrappers
# ---------------------------------------------------------------------------
def transform_pallas(x_bf16, w_bf16, dinv, *, tile_n):
    n_pad, f = x_bf16.shape
    h = w_bf16.shape[1]
    return pl.pallas_call(
        transform_kernel,
        out_shape=jax.ShapeDtypeStruct((n_pad, h), jnp.bfloat16),
        grid_spec=pltpu.PrefetchScalarGridSpec(
            num_scalar_prefetch=0,
            grid=(n_pad // tile_n,),
            in_specs=[
                pl.BlockSpec((tile_n, f), lambda i: (i, 0)),   # X tile
                pl.BlockSpec((f, h), lambda i: (0, 0)),        # W
                pl.BlockSpec((tile_n, 1), lambda i: (i, 0)),   # dinv (source side)
            ],
            out_specs=pl.BlockSpec((tile_n, h), lambda i: (i, 0)),
        ),
        compiler_params=pltpu.CompilerParams(
            dimension_semantics=("parallel",)),
    )(x_bf16, w_bf16, dinv)


def aggregate_pallas(a_bf16, h_bf16, dinv, b_pad, *, tile_n):
    n_pad = a_bf16.shape[0]
    hp = h_bf16.shape[1]
    grid = (n_pad // tile_n, n_pad // tile_n)
    return pl.pallas_call(
        aggregate_kernel,
        out_shape=jax.ShapeDtypeStruct((n_pad, hp), jnp.bfloat16),
        grid_spec=pltpu.PrefetchScalarGridSpec(
            num_scalar_prefetch=0,
            grid=grid,
            in_specs=[
                pl.BlockSpec((tile_n, tile_n), lambda i, k: (i, k)),  # A block (bf16)
                pl.BlockSpec((tile_n, hp), lambda i, k: (k, 0)),      # H block (bf16)
                pl.BlockSpec((tile_n, 1), lambda i, k: (i, 0)),       # dinv (dest side)
                pl.BlockSpec((1, hp), lambda i, k: (0, 0)),           # bias
            ],
            out_specs=pl.BlockSpec((tile_n, hp), lambda i, k: (i, 0)),
            scratch_shapes=[pltpu.VMEM((tile_n, hp), jnp.float32)],
        ),
        compiler_params=pltpu.CompilerParams(
            dimension_semantics=("parallel", "arbitrary")),
    )(a_bf16, h_bf16, dinv, b_pad)


def pool_fc_pallas(pool_bf16, h_bf16, inv_counts, wf, bf_, *, tile_n):
    g_pad, n_pad = pool_bf16.shape
    hp = h_bf16.shape[1]
    op = wf.shape[1]
    return pl.pallas_call(
        pool_fc_kernel,
        out_shape=jax.ShapeDtypeStruct((g_pad, op), jnp.float32),
        grid_spec=pltpu.PrefetchScalarGridSpec(
            num_scalar_prefetch=0,
            grid=(n_pad // tile_n,),
            in_specs=[
                pl.BlockSpec((g_pad, tile_n), lambda k: (0, k)),  # pool one-hot (bf16)
                pl.BlockSpec((tile_n, hp), lambda k: (k, 0)),     # H2 block (bf16)
                pl.BlockSpec((g_pad, 1), lambda k: (0, 0)),       # 1/count (f32)
                pl.BlockSpec((hp, op), lambda k: (0, 0)),         # fc W (f32)
                pl.BlockSpec((1, op), lambda k: (0, 0)),          # fc b (f32)
            ],
            out_specs=pl.BlockSpec((g_pad, op), lambda k: (0, 0)),
            scratch_shapes=[pltpu.VMEM((g_pad, hp), jnp.float32)],
        ),
        compiler_params=pltpu.CompilerParams(
            dimension_semantics=("arbitrary",)),
    )(pool_bf16, h_bf16, inv_counts, wf, bf_)


# ---------------------------------------------------------------------------
# Full forward
# ---------------------------------------------------------------------------
def gcn_forward(x, edge_index, batch, params, *, num_graphs, tile_n=256, lane=128):
    n, fin = x.shape
    hidden = params["w1"].shape[1]
    out_dim = params["fc_w"].shape[1]

    tile_n = min(tile_n, _round_up(n, 128))   # don't over-pad tiny graphs
    n_pad = _round_up(n, tile_n)
    fin_pad = _round_up(fin, lane)
    hid_pad = _round_up(hidden, lane)
    out_pad = _round_up(out_dim, lane)
    g_pad = _round_up(num_graphs, 8)

    src, dst = edge_index[0], edge_index[1]
    node_ids = jnp.arange(n)

    # ---- layer-invariant graph structure (built ONCE, shared by both layers) ----
    # PyG gcn_norm semantics: drop existing self-loops, add exactly one self-loop
    # per node (weight 1), degree on the destination index.
    ew = (src != dst).astype(jnp.float32)
    a = jnp.zeros((n_pad, n_pad), jnp.float32)
    a = a.at[dst, src].add(ew)                    # A[d, s] = #edges s->d (no self-loops)
    a = a.at[node_ids, node_ids].add(1.0)         # + one self-loop per real node
    deg = a.sum(axis=1)
    dinv = jnp.where(deg > 0, jax.lax.rsqrt(deg), 0.0)[:, None].astype(jnp.float32)
    a_bf16 = a.astype(jnp.bfloat16)               # exact small-integer counts (<=256)

    # ---- lane-padded, bf16 operands (padding is exact zeros everywhere) ----
    x_pad = jnp.zeros((n_pad, fin_pad), jnp.float32).at[:n, :fin].set(x).astype(jnp.bfloat16)
    w1 = jnp.zeros((fin_pad, hid_pad), jnp.float32).at[:fin, :hidden].set(
        params["w1"]).astype(jnp.bfloat16)
    b1 = jnp.zeros((1, hid_pad), jnp.float32).at[0, :hidden].set(params["b1"])
    w2 = jnp.zeros((hid_pad, hid_pad), jnp.float32).at[:hidden, :hidden].set(
        params["w2"]).astype(jnp.bfloat16)
    b2 = jnp.zeros((1, hid_pad), jnp.float32).at[0, :hidden].set(params["b2"])
    wf = jnp.zeros((hid_pad, out_pad), jnp.float32).at[:hidden, :out_dim].set(params["fc_w"])
    bf_ = jnp.zeros((1, out_pad), jnp.float32).at[0, :out_dim].set(params["fc_b"])

    # ---- conv1 -> relu ----
    h = transform_pallas(x_pad, w1, dinv, tile_n=tile_n)          # H1 = dinv ⊙ (X @ W1)
    h = aggregate_pallas(a_bf16, h, dinv, b1, tile_n=tile_n)      # relu(dinv ⊙ (A @ H1) + b1)
    # ---- conv2 -> relu ----
    h = transform_pallas(h, w2, dinv, tile_n=tile_n)
    h = aggregate_pallas(a_bf16, h, dinv, b2, tile_n=tile_n)

    # ---- global_mean_pool + fc (tiled reduction over nodes) ----
    g_oh = (batch[None, :] == jnp.arange(num_graphs)[:, None]).astype(jnp.float32)
    counts = jnp.maximum(g_oh.sum(axis=1, keepdims=True), 1.0)
    pool = jnp.zeros((g_pad, n_pad), jnp.float32).at[:num_graphs, :n].set(
        g_oh).astype(jnp.bfloat16)                                 # exact 0/1 one-hot
    inv_counts = jnp.zeros((g_pad, 1), jnp.float32).at[:num_graphs].set(1.0 / counts)

    out = pool_fc_pallas(pool, h, inv_counts, wf, bf_, tile_n=tile_n)
    return out[:num_graphs, :out_dim]


# ---------------------------------------------------------------------------
# Parameter construction (deterministic)
# ---------------------------------------------------------------------------
def init_gcn(key, in_dim, hidden_dim, out_dim):
    ks = jax.random.split(key, 6)

    def glorot(k, shape):
        fan_in, fan_out = shape
        s = jnp.sqrt(6.0 / (fan_in + fan_out))
        return jax.random.uniform(k, shape, jnp.float32, -s, s)

    return dict(
        w1=glorot(ks[0], (in_dim, hidden_dim)),
        b1=jax.random.normal(ks[1], (hidden_dim,), jnp.float32) * 0.1,
        w2=glorot(ks[2], (hidden_dim, hidden_dim)),
        b2=jax.random.normal(ks[3], (hidden_dim,), jnp.float32) * 0.1,
        fc_w=glorot(ks[4], (hidden_dim, out_dim)),
        fc_b=jax.random.normal(ks[5], (out_dim,), jnp.float32) * 0.1,
    )


# ---------------------------------------------------------------------------
# Pure-JAX f32 reference (segment ops, PyG GCNConv semantics)
# ---------------------------------------------------------------------------
def gcn_ref_forward(x, edge_index, batch, params, *, num_graphs):
    src, dst = edge_index[0], edge_index[1]
    n = x.shape[0]
    ids = jnp.arange(n)

    def conv(h, w, b):
        xw = h @ w
        s_all = jnp.concatenate([src, ids])
        d_all = jnp.concatenate([dst, ids])
        w_all = jnp.concatenate([(src != dst).astype(jnp.float32),
                                 jnp.ones((n,), jnp.float32)])
        deg = jax.ops.segment_sum(w_all, d_all, num_segments=n)
        dinv = jnp.where(deg > 0, 1.0 / jnp.sqrt(deg), 0.0)
        norm = dinv[s_all] * w_all * dinv[d_all]
        out = jax.ops.segment_sum(norm[:, None] * xw[s_all], d_all, num_segments=n)
        return out + b[None, :]

    h = jnp.maximum(conv(x, params["w1"], params["b1"]), 0.0)
    h = jnp.maximum(conv(h, params["w2"], params["b2"]), 0.0)
    g_oh = (batch[None, :] == jnp.arange(num_graphs)[:, None]).astype(jnp.float32)
    counts = jnp.maximum(g_oh.sum(axis=1, keepdims=True), 1.0)
    pooled = (g_oh / counts) @ h
    return pooled @ params["fc_w"] + params["fc_b"][None, :]


# ---------------------------------------------------------------------------
if __name__ == "__main__":
    # GCN(input_dim, hidden_dim, output_dim)
    input_dim = 8
    hidden_dim = 32
    output_dim = 4

    num_nodes = 16
    num_edges = 40
    num_graphs = 2

    root = jax.random.PRNGKey(0)
    k_x, k_src, k_dst, k_ea, k_par = jax.random.split(root, 5)

    x = jax.random.normal(k_x, (num_nodes, input_dim), jnp.float32)
    src = jax.random.randint(k_src, (num_edges,), 0, num_nodes, jnp.int32)
    dst = jax.random.randint(k_dst, (num_edges,), 0, num_nodes, jnp.int32)
    edge_index = jnp.stack([src, dst], axis=0)
    edge_attr = jax.random.normal(k_ea, (num_edges, 4), jnp.float32)  # unused by GCN.forward
    batch = jnp.repeat(jnp.arange(num_graphs, dtype=jnp.int32), num_nodes // num_graphs)

    params = init_gcn(k_par, input_dim, hidden_dim, output_dim)

    fwd = jax.jit(functools.partial(gcn_forward, num_graphs=num_graphs))
    out = jax.block_until_ready(fwd(x, edge_index, batch, params))

    ref = gcn_ref_forward(x, edge_index, batch, params, num_graphs=num_graphs)

    assert out.shape == (num_graphs, output_dim), out.shape
    # bf16 operands (x, W, H, layer outputs) -> loosened tolerance vs f32 reference
    assert jnp.allclose(out, ref, atol=5e-2, rtol=5e-2), (
        "mismatch", float(jnp.max(jnp.abs(out - ref))))

    print("KERNEL_OK")
</pallas_src>

<mosaic_0001>
module attributes {stable_mosaic.version = 11 : i64} {
  func.func private @main(%arg0: i32) attributes {dimension_semantics = [#tpu.dimension_semantics<core_parallel>], iteration_bounds = array<i64: 2>, tpu.core_type = #tpu.core_type<sc_scalar_subcore>, window_params = []} {
    return
  }
}

module attributes {stable_mosaic.version = 11 : i64} {
  func.func private @main(%arg0: i32) attributes {dimension_semantics = [#tpu.dimension_semantics<core_parallel>], iteration_bounds = array<i64: 2>, tpu.core_type = #tpu.core_type<sc_scalar_subcore>, window_params = []} {
    return
  }
}

module attributes {stable_mosaic.version = 11 : i64} {
  func.func @transform_kernel(%arg0: i32, %arg1: memref<128x128xbf16, #tpu.memory_space<vmem>>, %arg2: memref<128x128xbf16, #tpu.memory_space<vmem>>, %arg3: memref<128x1xf32, #tpu.memory_space<vmem>>, %arg4: memref<128x128xbf16, #tpu.memory_space<vmem>>) attributes {dimension_semantics = [#tpu.dimension_semantics<parallel>], iteration_bounds = array<i64: 1>, scalar_prefetch = 0 : i64, scratch_operands = 0 : i64, tpu.core_type = #tpu.core_type<tc>, window_params = [{transform_indices = @transform_0, window_bounds = array<i64: 128, 128>}, {pipeline_mode = #tpu.pipeline_mode<synchronous>, transform_indices = @transform_1, window_bounds = array<i64: 128, 128>}, {transform_indices = @transform_2, window_bounds = array<i64: 128, 1>}, {transform_indices = @transform_3, window_bounds = array<i64: 128, 128>}]} {
    %c0 = arith.constant 0 : index
    %c0_0 = arith.constant 0 : index
    %0 = vector.load %arg1[%c0, %c0_0] : memref<128x128xbf16, #tpu.memory_space<vmem>>, vector<128x128xbf16>
    %c0_1 = arith.constant 0 : index
    %c0_2 = arith.constant 0 : index
    %1 = vector.load %arg2[%c0_1, %c0_2] : memref<128x128xbf16, #tpu.memory_space<vmem>>, vector<128x128xbf16>
    %cst = arith.constant dense<0.000000e+00> : vector<128x128xf32>
    %2 = tpu.matmul %0, %1, %cst {dimension_numbers = #tpu.dot_dimension_numbers<[1], [0], [0], [1], [0, 0, 1, 1], [], []>} : vector<128x128xbf16>, vector<128x128xbf16>, vector<128x128xf32> -> vector<128x128xf32>
    %c0_3 = arith.constant 0 : index
    %c0_4 = arith.constant 0 : index
    %3 = vector.load %arg3[%c0_3, %c0_4] : memref<128x1xf32, #tpu.memory_space<vmem>>, vector<128x1xf32>
    %4 = vector.broadcast %3 : vector<128x1xf32> to vector<128x128xf32>
    %5 = arith.mulf %2, %4 : vector<128x128xf32>
    %6 = arith.truncf %5 : vector<128x128xf32> to vector<128x128xbf16>
    %c0_5 = arith.constant 0 : index
    %c0_6 = arith.constant 0 : index
    %7 = vector.load %arg4[%c0_5, %c0_6] : memref<128x128xbf16, #tpu.memory_space<vmem>>, vector<128x128xbf16>
    tpu.vector_store %arg4[%c0_5, %c0_6], %6 {strides = array<i32>} : memref<128x128xbf16, #tpu.memory_space<vmem>>, vector<128x128xbf16>,
    return
  }
  func.func @transform_0(%arg0: i32) -> (i32, i32) {
    %c0_i32 = arith.constant 0 : i32
    %c0_i32_0 = arith.constant 0 : i32
    return %arg0, %c0_i32 : i32, i32
  }
  func.func @transform_1(%arg0: i32) -> (i32, i32) {
    %c0_i32 = arith.constant 0 : i32
    %c0_i32_0 = arith.constant 0 : i32
    %c0_i32_1 = arith.constant 0 : i32
    return %c0_i32, %c0_i32_0 : i32, i32
  }
  func.func @transform_2(%arg0: i32) -> (i32, i32) {
    %c0_i32 = arith.constant 0 : i32
    %c0_i32_0 = arith.constant 0 : i32
    return %arg0, %c0_i32 : i32, i32
  }
  func.func @transform_3(%arg0: i32) -> (i32, i32) {
    %c0_i32 = arith.constant 0 : i32
    %c0_i32_0 = arith.constant 0 : i32
    return %arg0, %c0_i32 : i32, i32
  }
}

module attributes {stable_mosaic.version = 11 : i64} {
  func.func @aggregate_kernel(%arg0: i32, %arg1: i32, %arg2: memref<128x128xbf16, #tpu.memory_space<vmem>>, %arg3: memref<128x128xbf16, #tpu.memory_space<vmem>>, %arg4: memref<128x1xf32, #tpu.memory_space<vmem>>, %arg5: memref<1x128xf32, #tpu.memory_space<vmem>>, %arg6: memref<128x128xbf16, #tpu.memory_space<vmem>>, %arg7: memref<128x128xf32, #tpu.memory_space<vmem>>) attributes {dimension_semantics = [#tpu.dimension_semantics<parallel>, #tpu.dimension_semantics<arbitrary>], iteration_bounds = array<i64: 1, 1>, scalar_prefetch = 0 : i64, scratch_operands = 1 : i64, tpu.core_type = #tpu.core_type<tc>, window_params = [{transform_indices = @transform_0, window_bounds = array<i64: 128, 128>}, {transform_indices = @transform_1, window_bounds = array<i64: 128, 128>}, {transform_indices = @transform_2, window_bounds = array<i64: 128, 1>}, {pipeline_mode = #tpu.pipeline_mode<synchronous>, transform_indices = @transform_3, window_bounds = array<i64: 1, 128>}, {transform_indices = @transform_4, window_bounds = array<i64: 128, 128>}]} {
    %c0_i32 = arith.constant 0 : i32
    %0 = arith.cmpi eq, %arg1, %c0_i32 : i32
    %1 = arith.extui %0 : i1 to i32
    %c0_i32_0 = arith.constant 0 : i32
    %2 = arith.cmpi ne, %1, %c0_i32_0 : i32
    scf.if %2 {
      %cst_10 = arith.constant 0.000000e+00 : f32
      %12 = vector.broadcast %cst_10 : f32 to vector<128x128xf32>
      %c0_11 = arith.constant 0 : index
      %c0_12 = arith.constant 0 : index
      %13 = vector.load %arg7[%c0_11, %c0_12] : memref<128x128xf32, #tpu.memory_space<vmem>>, vector<128x128xf32>
      tpu.vector_store %arg7[%c0_11, %c0_12], %12 {strides = array<i32>} : memref<128x128xf32, #tpu.memory_space<vmem>>, vector<128x128xf32>,
    } else {
    }
    %c0 = arith.constant 0 : index
    %c0_1 = arith.constant 0 : index
    %3 = vector.load %arg7[%c0, %c0_1] : memref<128x128xf32, #tpu.memory_space<vmem>>, vector<128x128xf32>
    %c0_2 = arith.constant 0 : index
    %c0_3 = arith.constant 0 : index
    %4 = vector.load %arg2[%c0_2, %c0_3] : memref<128x128xbf16, #tpu.memory_space<vmem>>, vector<128x128xbf16>
    %c0_4 = arith.constant 0 : index
    %c0_5 = arith.constant 0 : index
    %5 = vector.load %arg3[%c0_4, %c0_5] : memref<128x128xbf16, #tpu.memory_space<vmem>>, vector<128x128xbf16>
    %cst = arith.constant dense<0.000000e+00> : vector<128x128xf32>
    %6 = tpu.matmul %4, %5, %cst {dimension_numbers = #tpu.dot_dimension_numbers<[1], [0], [0], [1], [0, 0, 1, 1], [], []>} : vector<128x128xbf16>, vector<128x128xbf16>, vector<128x128xf32> -> vector<128x128xf32>
    %7 = arith.addf %3, %6 : vector<128x128xf32>
    %c0_6 = arith.constant 0 : index
    %c0_7 = arith.constant 0 : index
    %8 = vector.load %arg7[%c0_6, %c0_7] : memref<128x128xf32, #tpu.memory_space<vmem>>, vector<128x128xf32>
    tpu.vector_store %arg7[%c0_6, %c0_7], %7 {strides = array<i32>} : memref<128x128xf32, #tpu.memory_space<vmem>>, vector<128x128xf32>,
    %c0_i32_8 = arith.constant 0 : i32
    %9 = arith.cmpi eq, %arg1, %c0_i32_8 : i32
    %10 = arith.extui %9 : i1 to i32
    %c0_i32_9 = arith.constant 0 : i32
    %11 = arith.cmpi ne, %10, %c0_i32_9 : i32
    scf.if %11 {
      %c0_10 = arith.constant 0 : index
      %c0_11 = arith.constant 0 : index
      %12 = vector.load %arg4[%c0_10, %c0_11] : memref<128x1xf32, #tpu.memory_space<vmem>>, vector<128x1xf32>
      %c0_12 = arith.constant 0 : index
      %c0_13 = arith.constant 0 : index
      %13 = vector.load %arg7[%c0_12, %c0_13] : memref<128x128xf32, #tpu.memory_space<vmem>>, vector<128x128xf32>
      %14 = vector.broadcast %12 : vector<128x1xf32> to vector<128x128xf32>
      %15 = arith.mulf %14, %13 : vector<128x128xf32>
      %c0_14 = arith.constant 0 : index
      %c0_15 = arith.constant 0 : index
      %16 = vector.load %arg5[%c0_14, %c0_15] : memref<1x128xf32, #tpu.memory_space<vmem>>, vector<1x128xf32>
      %17 = vector.broadcast %16 : vector<1x128xf32> to vector<128x128xf32>
      %18 = arith.addf %15, %17 : vector<128x128xf32>
      %cst_16 = arith.constant 0.000000e+00 : f32
      %19 = vector.broadcast %cst_16 : f32 to vector<128x128xf32>
      %20 = arith.maximumf %18, %19 : vector<128x128xf32>
      %21 = arith.truncf %20 : vector<128x128xf32> to vector<128x128xbf16>
      %c0_17 = arith.constant 0 : index
      %c0_18 = arith.constant 0 : index
      %22 = vector.load %arg6[%c0_17, %c0_18] : memref<128x128xbf16, #tpu.memory_space<vmem>>, vector<128x128xbf16>
      tpu.vector_store %arg6[%c0_17, %c0_18], %21 {strides = array<i32>} : memref<128x128xbf16, #tpu.memory_space<vmem>>, vector<128x128xbf16>,
    } else {
    }
    return
  }
  func.func @transform_0(%arg0: i32, %arg1: i32) -> (i32, i32) {
    %c0_i32 = arith.constant 0 : i32
    return %arg0, %arg1 : i32, i32
  }
  func.func @transform_1(%arg0: i32, %arg1: i32) -> (i32, i32) {
    %c0_i32 = arith.constant 0 : i32
    %c0_i32_0 = arith.constant 0 : i32
    return %arg1, %c0_i32 : i32, i32
  }
  func.func @transform_2(%arg0: i32, %arg1: i32) -> (i32, i32) {
    %c0_i32 = arith.constant 0 : i32
    %c0_i32_0 = arith.constant 0 : i32
    return %arg0, %c0_i32 : i32, i32
  }
  func.func @transform_3(%arg0: i32, %arg1: i32) -> (i32, i32) {
    %c0_i32 = arith.constant 0 : i32
    %c0_i32_0 = arith.constant 0 : i32
    %c0_i32_1 = arith.constant 0 : i32
    return %c0_i32, %c0_i32_0 : i32, i32
  }
  func.func @transform_4(%arg0: i32, %arg1: i32) -> (i32, i32) {
    %c0_i32 = arith.constant 0 : i32
    %c0_i32_0 = arith.constant 0 : i32
    return %arg0, %c0_i32 : i32, i32
  }
}

module attributes {stable_mosaic.version = 11 : i64} {
  func.func @pool_fc_kernel(%arg0: i32, %arg1: memref<8x128xbf16, #tpu.memory_space<vmem>>, %arg2: memref<128x128xbf16, #tpu.memory_space<vmem>>, %arg3: memref<8x1xf32, #tpu.memory_space<vmem>>, %arg4: memref<128x128xf32, #tpu.memory_space<vmem>>, %arg5: memref<1x128xf32, #tpu.memory_space<vmem>>, %arg6: memref<8x128xf32, #tpu.memory_space<vmem>>, %arg7: memref<8x128xf32, #tpu.memory_space<vmem>>) attributes {dimension_semantics = [#tpu.dimension_semantics<arbitrary>], iteration_bounds = array<i64: 1>, scalar_prefetch = 0 : i64, scratch_operands = 1 : i64, tpu.core_type = #tpu.core_type<tc>, window_params = [{transform_indices = @transform_0, window_bounds = array<i64: 8, 128>}, {transform_indices = @transform_1, window_bounds = array<i64: 128, 128>}, {pipeline_mode = #tpu.pipeline_mode<synchronous>, transform_indices = @transform_2, window_bounds = array<i64: 8, 1>}, {pipeline_mode = #tpu.pipeline_mode<synchronous>, transform_indices = @transform_3, window_bounds = array<i64: 128, 128>}, {pipeline_mode = #tpu.pipeline_mode<synchronous>, transform_indices = @transform_4, window_bounds = array<i64: 1, 128>}, {pipeline_mode = #tpu.pipeline_mode<synchronous>, transform_indices = @transform_5, window_bounds = array<i64: 8, 128>}]} {
    %c0_i32 = arith.constant 0 : i32
    %0 = arith.cmpi eq, %arg0, %c0_i32 : i32
    %1 = arith.extui %0 : i1 to i32
    %c0_i32_0 = arith.constant 0 : i32
    %2 = arith.cmpi ne, %1, %c0_i32_0 : i32
    scf.if %2 {
      %cst_10 = arith.constant 0.000000e+00 : f32
      %12 = vector.broadcast %cst_10 : f32 to vector<8x128xf32>
      %c0_11 = arith.constant 0 : index
      %c0_12 = arith.constant 0 : index
      %13 = vector.load %arg7[%c0_11, %c0_12] : memref<8x128xf32, #tpu.memory_space<vmem>>, vector<8x128xf32>
      tpu.vector_store %arg7[%c0_11, %c0_12], %12 {strides = array<i32>} : memref<8x128xf32, #tpu.memory_space<vmem>>, vector<8x128xf32>,
    } else {
    }
    %c0 = arith.constant 0 : index
    %c0_1 = arith.constant 0 : index
    %3 = vector.load %arg7[%c0, %c0_1] : memref<8x128xf32, #tpu.memory_space<vmem>>, vector<8x128xf32>
    %c0_2 = arith.constant 0 : index
    %c0_3 = arith.constant 0 : index
    %4 = vector.load %arg1[%c0_2, %c0_3] : memref<8x128xbf16, #tpu.memory_space<vmem>>, vector<8x128xbf16>
    %c0_4 = arith.constant 0 : index
    %c0_5 = arith.constant 0 : index
    %5 = vector.load %arg2[%c0_4, %c0_5] : memref<128x128xbf16, #tpu.memory_space<vmem>>, vector<128x128xbf16>
    %cst = arith.constant dense<0.000000e+00> : vector<8x128xf32>
    %6 = tpu.matmul %4, %5, %cst {dimension_numbers = #tpu.dot_dimension_numbers<[1], [0], [0], [1], [0, 0, 1, 1], [], []>} : vector<8x128xbf16>, vector<128x128xbf16>, vector<8x128xf32> -> vector<8x128xf32>
    %7 = arith.addf %3, %6 : vector<8x128xf32>
    %c0_6 = arith.constant 0 : index
    %c0_7 = arith.constant 0 : index
    %8 = vector.load %arg7[%c0_6, %c0_7] : memref<8x128xf32, #tpu.memory_space<vmem>>, vector<8x128xf32>
    tpu.vector_store %arg7[%c0_6, %c0_7], %7 {strides = array<i32>} : memref<8x128xf32, #tpu.memory_space<vmem>>, vector<8x128xf32>,
    %c0_i32_8 = arith.constant 0 : i32
    %9 = arith.cmpi eq, %arg0, %c0_i32_8 : i32
    %10 = arith.extui %9 : i1 to i32
    %c0_i32_9 = arith.constant 0 : i32
    %11 = arith.cmpi ne, %10, %c0_i32_9 : i32
    scf.if %11 {
      %c0_10 = arith.constant 0 : index
      %c0_11 = arith.constant 0 : index
      %12 = vector.load %arg7[%c0_10, %c0_11] : memref<8x128xf32, #tpu.memory_space<vmem>>, vector<8x128xf32>
      %c0_12 = arith.constant 0 : index
      %c0_13 = arith.constant 0 : index
      %13 = vector.load %arg3[%c0_12, %c0_13] : memref<8x1xf32, #tpu.memory_space<vmem>>, vector<8x1xf32>
      %14 = vector.broadcast %13 : vector<8x1xf32> to vector<8x128xf32>
      %15 = arith.mulf %12, %14 : vector<8x128xf32>
      %c0_14 = arith.constant 0 : index
      %c0_15 = arith.constant 0 : index
      %16 = vector.load %arg4[%c0_14, %c0_15] : memref<128x128xf32, #tpu.memory_space<vmem>>, vector<128x128xf32>
      %cst_16 = arith.constant dense<0.000000e+00> : vector<8x128xf32>
      %17 = tpu.matmul %15, %16, %cst_16 {dimension_numbers = #tpu.dot_dimension_numbers<[1], [0], [0], [1], [0, 0, 1, 1], [], []>} : vector<8x128xf32>, vector<128x128xf32>, vector<8x128xf32> -> vector<8x128xf32>
      %c0_17 = arith.constant 0 : index
      %c0_18 = arith.constant 0 : index
      %18 = vector.load %arg5[%c0_17, %c0_18] : memref<1x128xf32, #tpu.memory_space<vmem>>, vector<1x128xf32>
      %19 = vector.broadcast %18 : vector<1x128xf32> to vector<8x128xf32>
      %20 = arith.addf %17, %19 : vector<8x128xf32>
      %c0_19 = arith.constant 0 : index
      %c0_20 = arith.constant 0 : index
      %21 = vector.load %arg6[%c0_19, %c0_20] : memref<8x128xf32, #tpu.memory_space<vmem>>, vector<8x128xf32>
      tpu.vector_store %arg6[%c0_19, %c0_20], %20 {strides = array<i32>} : memref<8x128xf32, #tpu.memory_space<vmem>>, vector<8x128xf32>,
    } else {
    }
    return
  }
  func.func @transform_0(%arg0: i32) -> (i32, i32) {
    %c0_i32 = arith.constant 0 : i32
    %c0_i32_0 = arith.constant 0 : i32
    return %c0_i32, %arg0 : i32, i32
  }
  func.func @transform_1(%arg0: i32) -> (i32, i32) {
    %c0_i32 = arith.constant 0 : i32
    %c0_i32_0 = arith.constant 0 : i32
    return %arg0, %c0_i32 : i32, i32
  }
  func.func @transform_2(%arg0: i32) -> (i32, i32) {
    %c0_i32 = arith.constant 0 : i32
    %c0_i32_0 = arith.constant 0 : i32
    %c0_i32_1 = arith.constant 0 : i32
    return %c0_i32, %c0_i32_0 : i32, i32
  }
  func.func @transform_3(%arg0: i32) -> (i32, i32) {
    %c0_i32 = arith.constant 0 : i32
    %c0_i32_0 = arith.constant 0 : i32
    %c0_i32_1 = arith.constant 0 : i32
    return %c0_i32, %c0_i32_0 : i32, i32
  }
  func.func @transform_4(%arg0: i32) -> (i32, i32) {
    %c0_i32 = arith.constant 0 : i32
    %c0_i32_0 = arith.constant 0 : i32
    %c0_i32_1 = arith.constant 0 : i32
    return %c0_i32, %c0_i32_0 : i32, i32
  }
  func.func @transform_5(%arg0: i32) -> (i32, i32) {
    %c0_i32 = arith.constant 0 : i32
    %c0_i32_0 = arith.constant 0 : i32
    %c0_i32_1 = arith.constant 0 : i32
    return %c0_i32, %c0_i32_0 : i32, i32
  }
}

</mosaic_0001>

<llo_original>
// kernel: gcn_forward.9
$region0: #{gcn_forward.9}
  #allocation0 [shape = 'u32[]', space=smem, size = 0x4, offset = 0x4, fixed_abs, tag = 'smem constant byte address 0x4 - core index']
  #allocation1 [shape = 'u32[144,128]{1,0:T(1,128)}', space=vmem, size = 0x12000, scoped, tag = 'internal scratch']
  #allocation2 [shape = 'f32[8,128]{1,0:T(8,128)}', space=vmem, size = 0x1000, scoped, tag = 'scratch operand']
  %s0 = inlined_call_operand.vmem [shape: bf16[8,128], index: 0, kind: input, shape index: {}]
  %s1 = inlined_call_operand.vmem [shape: bf16[128,128], index: 1, kind: input, shape index: {}]
  %s2 = inlined_call_operand.vmem [shape: f32[8,1], index: 2, kind: input, shape index: {}]
  %s3 = inlined_call_operand.vmem [shape: f32[128,128], index: 3, kind: input, shape index: {}]
  %s4 = inlined_call_operand.vmem [shape: f32[1,128], index: 4, kind: input, shape index: {}]
  %s5 = inlined_call_operand.vmem [shape: f32[8,128], index: 5, kind: output, shape index: {}]
  %s6 = sld [smem:[#allocation0]]
  $region38: #{gcn_forward.9} parent=0
    _
  %s8 = ssub.s32 1, %s6
  %s9 = scalar_select 0, %s8, %s6
  // Predicated region
  $region2: #{gcn_forward.9} parent=0 // pred_check
    _
  $region3: #{gcn_forward.9} parent=0 // pred_check_branch
    %11 = sbr.rel (0) target = $region5
  $region4: #{gcn_forward.9} parent=0 // pred_region
    _
  $region5: #{gcn_forward.9} parent=0 // pred_fallthru
    _
  // Predicated region
  $region6: #{gcn_forward.9} parent=0 // pred_check
    _
  $region7: #{gcn_forward.9} parent=0 // pred_check_branch
    %13 = sbr.rel (0) target = $region9
  $region8: #{gcn_forward.9} parent=0 // pred_region
    _
  $region9: #{gcn_forward.9} parent=0 // pred_fallthru
    _
  // Predicated region
  $region10: #{gcn_forward.9} parent=0 // pred_check
    _
  $region11: #{gcn_forward.9} parent=0 // pred_check_branch
    %15 = sbr.rel (0) target = $region13
  $region12: #{gcn_forward.9} parent=0 // pred_region
    _
  $region13: #{gcn_forward.9} parent=0 // pred_fallthru
    _
  // Predicated region
  $region14: #{gcn_forward.9} parent=0 // pred_check
    _
  $region15: #{gcn_forward.9} parent=0 // pred_check_branch
    %17 = sbr.rel (0) target = $region17
  $region16: #{gcn_forward.9} parent=0 // pred_region
    _
  $region17: #{gcn_forward.9} parent=0 // pred_fallthru
    _
  // Predicated region
  $region18: #{gcn_forward.9} parent=0 // pred_check
    _
  $region19: #{gcn_forward.9} parent=0 // pred_check_branch
    %19 = sbr.rel (0) target = $region21
  $region20: #{gcn_forward.9} parent=0 // pred_region
    _
  $region21: #{gcn_forward.9} parent=0 // pred_fallthru
    _
  %p21 = scmp.eq.s32.totalorder 0, 0
  // Predicated region
  $region22: #{gcn_forward.9} parent=0 // pred_check
    %p22 = pneg %p21
  $region23: #{gcn_forward.9} parent=0 // pred_check_branch
    %24 = sbr.rel (%p22) target = $region25
  $region24: #{gcn_forward.9} parent=0 // pred_region
    %25 = vst [vmem:[#allocation2] sm:$0xff] 0.0
  $region25: #{gcn_forward.9} parent=0 // pred_fallthru
    _
  %v26 = vld [vmem:[#allocation2] sm:$0xff]
  %v27 = vld [vmem:[%s0] sm:$0xf]
  %v28 = vld [vmem:[%s1] sm:$0xf]
  %v29 = vld [vmem:[%s1 + $0x4] sm:$0xf]
  %v30 = vld [vmem:[%s1 + $0x8] sm:$0xf]
  %v31 = vld [vmem:[%s1 + $0xc] sm:$0xf]
  %v32 = vld [vmem:[%s1 + $0x10] sm:$0xf]
  %v33 = vld [vmem:[%s1 + $0x14] sm:$0xf]
  %v34 = vld [vmem:[%s1 + $0x18] sm:$0xf]
  %v35 = vld [vmem:[%s1 + $0x1c] sm:$0xf]
  %v36 = vld [vmem:[%s1 + $0x20] sm:$0xf]
  %v37 = vld [vmem:[%s1 + $0x24] sm:$0xf]
  %v38 = vld [vmem:[%s1 + $0x28] sm:$0xf]
  %v39 = vld [vmem:[%s1 + $0x2c] sm:$0xf]
  %v40 = vld [vmem:[%s1 + $0x30] sm:$0xf]
  %v41 = vld [vmem:[%s1 + $0x34] sm:$0xf]
  %v42 = vld [vmem:[%s1 + $0x38] sm:$0xf]
  %v43 = vld [vmem:[%s1 + $0x3c] sm:$0xf]
  %v60 = vunpack.c.l.b16 %v28
  %v61 = vunpack.c.l.b16 %v29
  %v62 = vunpack.c.l.b16 %v30
  %v63 = vunpack.c.l.b16 %v31
  %v64 = vunpack.c.l.b16 %v32
  %v65 = vunpack.c.l.b16 %v33
  %v66 = vunpack.c.l.b16 %v34
  %v67 = vunpack.c.l.b16 %v35
  %v68 = vunpack.c.l.b16 %v36
  %v69 = vunpack.c.l.b16 %v37
  %v70 = vunpack.c.l.b16 %v38
  %v71 = vunpack.c.l.b16 %v39
  %v72 = vunpack.c.l.b16 %v40
  %v73 = vunpack.c.l.b16 %v41
  %v74 = vunpack.c.l.b16 %v42
  %v75 = vunpack.c.l.b16 %v43
  %v76 = vpack.c.b16 %v61, %v60
  %v77 = vpack.c.b16 %v63, %v62
  %v78 = vpack.c.b16 %v65, %v64
  %v79 = vpack.c.b16 %v67, %v66
  %v80 = vpack.c.b16 %v69, %v68
  %v81 = vpack.c.b16 %v71, %v70
  %v82 = vpack.c.b16 %v73, %v72
  %v83 = vpack.c.b16 %v75, %v74
  %92 = vmatprep.subr.bf16.mxu0 0
  %93 = vmatpush1.bf16.msra.mxu0 %v83
  %94 = vmatprep.subr.bf16.mxu0 0
  %95 = vmatpush1.bf16.msra.mxu0 %v82
  %96 = vmatprep.subr.bf16.mxu0 0
  %97 = vmatpush1.bf16.msra.mxu0 %v81
  %98 = vmatprep.subr.bf16.mxu0 0
  %99 = vmatpush1.bf16.msra.mxu0 %v80
  %100 = vmatprep.subr.bf16.mxu0 0
  %101 = vmatpush1.bf16.msra.mxu0 %v79
  %102 = vmatprep.subr.bf16.mxu0 0
  %103 = vmatpush1.bf16.msra.mxu0 %v78
  %104 = vmatprep.subr.bf16.mxu0 0
  %105 = vmatpush1.bf16.msra.mxu0 %v77
  %106 = vmatprep.subr.bf16.mxu0 0
  %107 = vmatpush1.bf16.msra.mxu0 %v76
  %108 = vmatprep.subr.bf16.mxu0 0
  %109 = vmatpush2.bf16.msra.mxu0 0
  %110 = vmatprep.subr.bf16.mxu0 0
  %111 = vmatpush2.bf16.msra.mxu0 0
  %112 = vmatprep.subr.bf16.mxu0 0
  %113 = vmatpush2.bf16.msra.mxu0 0
  %114 = vmatprep.subr.bf16.mxu0 0
  %115 = vmatpush2.bf16.msra.mxu0 0
  %116 = vmatprep.subr.bf16.mxu0 0
  %117 = vmatpush2.bf16.msra.mxu0 0
  %118 = vmatprep.subr.bf16.mxu0 0
  %119 = vmatpush2.bf16.msra.mxu0 0
  %120 = vmatprep.subr.bf16.mxu0 0
  %121 = vmatpush2.bf16.msra.mxu0 0
  %122 = vmatprep.subr.bf16.mxu0 0
  %123 = vmatpush2.bf16.msra.mxu0 0
  %124 = vmatprep.mubr.bf16.mxu0 0
  %125 = vmatmul.mubr.bf16.gmra.mxu0 %v27
  %v126 = vpop.f32.mrf.mxu0
  %v127 = vadd.f32 0.0, %v126
  %v128 = vpop.f32.mrf.mxu0
  %v129 = vpop.f32.mrf.mxu0
  %v130 = vpop.f32.mrf.mxu0
  %131 = vdwg.mxu0
  %v132 = vadd.f32 %v26, %v127
  %133 = vst [vmem:[#allocation2] sm:$0xff] %v132
  // Predicated region
  $region26: #{gcn_forward.9} parent=0 // pred_check
    %p134 = pneg %p21
  $region27: #{gcn_forward.9} parent=0 // pred_check_branch
    %136 = sbr.rel (%p134) target = $region29
  $region28: #{gcn_forward.9} parent=0 // pred_region
    %v137 = vld [vmem:[#allocation2] sm:$0xff]
    %v138 = vld [vmem:[%s2] sm:$0xff]
    %140 = vset.pattern.permute.xlu0 0
    %141 = vperm.xlu0 %140, %v138
    %v142 = vpop.permute.xlu0 %141
    %v144 = vmul.f32 %v137, %v142
    %v145 = vld [vmem:[%s3] sm:$0xff]
    %v146 = vld [vmem:[%s3 + $0x8] sm:$0xff]
    %v147 = vld [vmem:[%s3 + $0x10] sm:$0xff]
    %v148 = vld [vmem:[%s3 + $0x18] sm:$0xff]
    %v149 = vld [vmem:[%s3 + $0x20] sm:$0xff]
    %v150 = vld [vmem:[%s3 + $0x28] sm:$0xff]
    %v151 = vld [vmem:[%s3 + $0x30] sm:$0xff]
    %v152 = vld [vmem:[%s3 + $0x38] sm:$0xff]
    %v153 = vld [vmem:[%s3 + $0x40] sm:$0xff]
    %v154 = vld [vmem:[%s3 + $0x48] sm:$0xff]
    %v155 = vld [vmem:[%s3 + $0x50] sm:$0xff]
    %v156 = vld [vmem:[%s3 + $0x58] sm:$0xff]
    %v157 = vld [vmem:[%s3 + $0x60] sm:$0xff]
    %v158 = vld [vmem:[%s3 + $0x68] sm:$0xff]
    %v159 = vld [vmem:[%s3 + $0x70] sm:$0xff]
    %v160 = vld [vmem:[%s3 + $0x78] sm:$0xff]
    %v161 = vld [vmem:[%s4] sm:$0x1]
    %v163 = vlaneseq
    %v164 = vshrl.u32 %v163, 7
    %v165 = vsub.s32 0, %v164
    %v166 = vrot.slane %v161, %v165
    %168 = vmatprep.subr.mxu0 0.0
    %169 = vmatpush1.msra.mxu0 %v160
    %170 = vmatprep.subr.mxu0 0.0
    %171 = vmatpush1.msra.mxu0 %v159
    %172 = vmatprep.subr.mxu0 0.0
    %173 = vmatpush1.msra.mxu0 %v158
    %174 = vmatprep.subr.mxu0 0.0
    %175 = vmatpush1.msra.mxu0 %v157
    %176 = vmatprep.subr.mxu0 0.0
    %177 = vmatpush1.msra.mxu0 %v156
    %178 = vmatprep.subr.mxu0 0.0
    %179 = vmatpush1.msra.mxu0 %v155
    %180 = vmatprep.subr.mxu0 0.0
    %181 = vmatpush1.msra.mxu0 %v154
    %182 = vmatprep.subr.mxu0 0.0
    %183 = vmatpush1.msra.mxu0 %v153
    %184 = vmatprep.subr.mxu0 0.0
    %185 = vmatpush1.msra.mxu0 %v152
    %186 = vmatprep.subr.mxu0 0.0
    %187 = vmatpush1.msra.mxu0 %v151
    %188 = vmatprep.subr.mxu0 0.0
    %189 = vmatpush1.msra.mxu0 %v150
    %190 = vmatprep.subr.mxu0 0.0
    %191 = vmatpush1.msra.mxu0 %v149
    %192 = vmatprep.subr.mxu0 0.0
    %193 = vmatpush1.msra.mxu0 %v148
    %194 = vmatprep.subr.mxu0 0.0
    %195 = vmatpush1.msra.mxu0 %v147
    %196 = vmatprep.subr.mxu0 0.0
    %197 = vmatpush1.msra.mxu0 %v146
    %198 = vmatprep.subr.mxu0 0.0
    %199 = vmatpush1.msra.mxu0 %v145
    %200 = vmatprep.subr.mxu0 0.0
    %201 = vmatpush2.msra.mxu0 0.0
    %202 = vmatprep.subr.mxu0 0.0
    %203 = vmatpush2.msra.mxu0 0.0
    %204 = vmatprep.subr.mxu0 0.0
    %205 = vmatpush2.msra.mxu0 0.0
    %206 = vmatprep.subr.mxu0 0.0
    %207 = vmatpush2.msra.mxu0 0.0
    %208 = vmatprep.subr.mxu0 0.0
    %209 = vmatpush2.msra.mxu0 0.0
    %210 = vmatprep.subr.mxu0 0.0
    %211 = vmatpush2.msra.mxu0 0.0
    %212 = vmatprep.subr.mxu0 0.0
    %213 = vmatpush2.msra.mxu0 0.0
    %214 = vmatprep.subr.mxu0 0.0
    %215 = vmatpush2.msra.mxu0 0.0
    %216 = vmatprep.subr.mxu0 0.0
    %217 = vmatpush2.msra.mxu0 0.0
    %218 = vmatprep.subr.mxu0 0.0
    %219 = vmatpush2.msra.mxu0 0.0
    %220 = vmatprep.subr.mxu0 0.0
    %221 = vmatpush2.msra.mxu0 0.0
    %222 = vmatprep.subr.mxu0 0.0
    %223 = vmatpush2.msra.mxu0 0.0
    %224 = vmatprep.subr.mxu0 0.0
    %225 = vmatpush2.msra.mxu0 0.0
    %226 = vmatprep.subr.mxu0 0.0
    %227 = vmatpush2.msra.mxu0 0.0
    %228 = vmatprep.subr.mxu0 0.0
    %229 = vmatpush2.msra.mxu0 0.0
    %230 = vmatprep.subr.mxu0 0.0
    %231 = vmatpush2.msra.mxu0 0.0
    %232 = vmatprep.mubr.f32.mxu0 0.0
    %233 = vmatmul.mubr.f32.gmra.mxu0 %v144
    %v234 = vpop.f32.mrf.mxu0
    %v235 = vadd.f32 %v166, %v234
    %v236 = vpop.f32.mrf.mxu0
    %237 = vdwg.mxu0
    %238 = vst [vmem:[%s5] sm:$0xff] %v235
  $region29: #{gcn_forward.9} parent=0 // pred_fallthru
    _
  // Predicated region
  $region30: #{gcn_forward.9} parent=0 // pred_check
    _
  $region31: #{gcn_forward.9} parent=0 // pred_check_branch
    %240 = sbr.rel (0) target = $region33
  $region32: #{gcn_forward.9} parent=0 // pred_region
    _
  $region33: #{gcn_forward.9} parent=0 // pred_fallthru
    _
  // Predicated region
  $region34: #{gcn_forward.9} parent=0 // pred_check
    _
  $region35: #{gcn_forward.9} parent=0 // pred_check_branch
    %242 = sbr.rel (0) target = $region37
  $region36: #{gcn_forward.9} parent=0 // pred_region
    _
  $region37: #{gcn_forward.9} parent=0 // pred_fallthru
    _

// kernel: gcn_forward.5
$region0: #{gcn_forward.5}
  #allocation0 [shape = 'u32[]', space=smem, size = 0x4, offset = 0x4, fixed_abs, tag = 'smem constant byte address 0x4 - core index']
  #allocation1 [shape = 'u32[144,128]{1,0:T(1,128)}', space=vmem, size = 0x12000, scoped, tag = 'internal scratch']
  %s0 = inlined_call_operand.vmem [shape: bf16[128,128], index: 0, kind: input, shape index: {}]
  %s1 = inlined_call_operand.vmem [shape: bf16[128,128], index: 1, kind: input, shape index: {}]
  %s2 = inlined_call_operand.vmem [shape: f32[128,1], index: 2, kind: input, shape index: {}]
  %s3 = inlined_call_operand.vmem [shape: bf16[128,128], index: 3, kind: output, shape index: {}]
  %s4 = sld [smem:[#allocation0]]
  $region22: #{gcn_forward.5} parent=0
    _
  %s6 = ssub.s32 1, %s4
  %s7 = scalar_select 0, %s6, %s4
  // Predicated region
  $region2: #{gcn_forward.5} parent=0 // pred_check
    _
  $region3: #{gcn_forward.5} parent=0 // pred_check_branch
    %9 = sbr.rel (0) target = $region5
  $region4: #{gcn_forward.5} parent=0 // pred_region
    _
  $region5: #{gcn_forward.5} parent=0 // pred_fallthru
    _
  // Predicated region
  $region6: #{gcn_forward.5} parent=0 // pred_check
    _
  $region7: #{gcn_forward.5} parent=0 // pred_check_branch
    %11 = sbr.rel (0) target = $region9
  $region8: #{gcn_forward.5} parent=0 // pred_region
    _
  $region9: #{gcn_forward.5} parent=0 // pred_fallthru
    _
  // Predicated region
  $region10: #{gcn_forward.5} parent=0 // pred_check
    _
  $region11: #{gcn_forward.5} parent=0 // pred_check_branch
    %13 = sbr.rel (0) target = $region13
  $region12: #{gcn_forward.5} parent=0 // pred_region
    _
  $region13: #{gcn_forward.5} parent=0 // pred_fallthru
    _
  %v15 = vld [vmem:[%s0] sm:$0xf]
  %v16 = vld [vmem:[%s0 + $0x4] sm:$0xf]
  %v17 = vld [vmem:[%s0 + $0x8] sm:$0xf]
  %v18 = vld [vmem:[%s0 + $0xc] sm:$0xf]
  %v19 = vld [vmem:[%s0 + $0x10] sm:$0xf]
  %v20 = vld [vmem:[%s0 + $0x14] sm:$0xf]
  %v21 = vld [vmem:[%s0 + $0x18] sm:$0xf]
  %v22 = vld [vmem:[%s0 + $0x1c] sm:$0xf]
  %v23 = vld [vmem:[%s0 + $0x20] sm:$0xf]
  %v24 = vld [vmem:[%s0 + $0x24] sm:$0xf]
  %v25 = vld [vmem:[%s0 + $0x28] sm:$0xf]
  %v26 = vld [vmem:[%s0 + $0x2c] sm:$0xf]
  %v27 = vld [vmem:[%s0 + $0x30] sm:$0xf]
  %v28 = vld [vmem:[%s0 + $0x34] sm:$0xf]
  %v29 = vld [vmem:[%s0 + $0x38] sm:$0xf]
  %v30 = vld [vmem:[%s0 + $0x3c] sm:$0xf]
  %v31 = vld [vmem:[%s1] sm:$0xf]
  %v32 = vld [vmem:[%s1 + $0x4] sm:$0xf]
  %v33 = vld [vmem:[%s1 + $0x8] sm:$0xf]
  %v34 = vld [vmem:[%s1 + $0xc] sm:$0xf]
  %v35 = vld [vmem:[%s1 + $0x10] sm:$0xf]
  %v36 = vld [vmem:[%s1 + $0x14] sm:$0xf]
  %v37 = vld [vmem:[%s1 + $0x18] sm:$0xf]
  %v38 = vld [vmem:[%s1 + $0x1c] sm:$0xf]
  %v39 = vld [vmem:[%s1 + $0x20] sm:$0xf]
  %v40 = vld [vmem:[%s1 + $0x24] sm:$0xf]
  %v41 = vld [vmem:[%s1 + $0x28] sm:$0xf]
  %v42 = vld [vmem:[%s1 + $0x2c] sm:$0xf]
  %v43 = vld [vmem:[%s1 + $0x30] sm:$0xf]
  %v44 = vld [vmem:[%s1 + $0x34] sm:$0xf]
  %v45 = vld [vmem:[%s1 + $0x38] sm:$0xf]
  %v46 = vld [vmem:[%s1 + $0x3c] sm:$0xf]
  %v63 = vunpack.c.l.b16 %v15
  %v64 = vunpack.c.l.b16 %v16
  %v65 = vunpack.c.l.b16 %v17
  %v66 = vunpack.c.l.b16 %v18
  %v67 = vunpack.c.l.b16 %v19
  %v68 = vunpack.c.l.b16 %v20
  %v69 = vunpack.c.l.b16 %v21
  %v70 = vunpack.c.l.b16 %v22
  %v71 = vunpack.c.l.b16 %v23
  %v72 = vunpack.c.l.b16 %v24
  %v73 = vunpack.c.l.b16 %v25
  %v74 = vunpack.c.l.b16 %v26
  %v75 = vunpack.c.l.b16 %v27
  %v76 = vunpack.c.l.b16 %v28
  %v77 = vunpack.c.l.b16 %v29
  %v78 = vunpack.c.l.b16 %v30
  %v79 = vpack.c.b16 %v64, %v63
  %v80 = vpack.c.b16 %v66, %v65
  %v81 = vpack.c.b16 %v68, %v67
  %v82 = vpack.c.b16 %v70, %v69
  %v83 = vpack.c.b16 %v72, %v71
  %v84 = vpack.c.b16 %v74, %v73
  %v85 = vpack.c.b16 %v76, %v75
  %v86 = vpack.c.b16 %v78, %v77
  %v111 = vunpack.c.l.b16 %v31
  %v112 = vunpack.c.l.b16 %v32
  %v113 = vunpack.c.l.b16 %v33
  %v114 = vunpack.c.l.b16 %v34
  %v115 = vunpack.c.l.b16 %v35
  %v116 = vunpack.c.l.b16 %v36
  %v117 = vunpack.c.l.b16 %v37
  %v118 = vunpack.c.l.b16 %v38
  %v119 = vunpack.c.l.b16 %v39
  %v120 = vunpack.c.l.b16 %v40
  %v121 = vunpack.c.l.b16 %v41
  %v122 = vunpack.c.l.b16 %v42
  %v123 = vunpack.c.l.b16 %v43
  %v124 = vunpack.c.l.b16 %v44
  %v125 = vunpack.c.l.b16 %v45
  %v126 = vunpack.c.l.b16 %v46
  %v127 = vpack.c.b16 %v112, %v111
  %v128 = vpack.c.b16 %v114, %v113
  %v129 = vpack.c.b16 %v116, %v115
  %v130 = vpack.c.b16 %v118, %v117
  %v131 = vpack.c.b16 %v120, %v119
  %v132 = vpack.c.b16 %v122, %v121
  %v133 = vpack.c.b16 %v124, %v123
  %v134 = vpack.c.b16 %v126, %v125
  %143 = vmatprep.subr.bf16.mxu0 0
  %144 = vmatpush1.bf16.msra.mxu0 %v134
  %145 = vmatprep.subr.bf16.mxu0 0
  %146 = vmatpush1.bf16.msra.mxu0 %v133
  %147 = vmatprep.subr.bf16.mxu0 0
  %148 = vmatpush1.bf16.msra.mxu0 %v132
  %149 = vmatprep.subr.bf16.mxu0 0
  %150 = vmatpush1.bf16.msra.mxu0 %v131
  %151 = vmatprep.subr.bf16.mxu0 0
  %152 = vmatpush1.bf16.msra.mxu0 %v130
  %153 = vmatprep.subr.bf16.mxu0 0
  %154 = vmatpush1.bf16.msra.mxu0 %v129
  %155 = vmatprep.subr.bf16.mxu0 0
  %156 = vmatpush1.bf16.msra.mxu0 %v128
  %157 = vmatprep.subr.bf16.mxu0 0
  %158 = vmatpush1.bf16.msra.mxu0 %v127
  %159 = vmatprep.subr.bf16.mxu0 0
  %160 = vmatpush2.bf16.msra.mxu0 0
  %161 = vmatprep.subr.bf16.mxu0 0
  %162 = vmatpush2.bf16.msra.mxu0 0
  %163 = vmatprep.subr.bf16.mxu0 0
  %164 = vmatpush2.bf16.msra.mxu0 0
  %165 = vmatprep.subr.bf16.mxu0 0
  %166 = vmatpush2.bf16.msra.mxu0 0
  %167 = vmatprep.subr.bf16.mxu0 0
  %168 = vmatpush2.bf16.msra.mxu0 0
  %169 = vmatprep.subr.bf16.mxu0 0
  %170 = vmatpush2.bf16.msra.mxu0 0
  %171 = vmatprep.subr.bf16.mxu0 0
  %172 = vmatpush2.bf16.msra.mxu0 0
  %173 = vmatprep.subr.bf16.mxu0 0
  %174 = vmatpush2.bf16.msra.mxu0 0
  %175 = vmatprep.mubr.bf16.mxu0 0
  %176 = vmatmul.mubr.bf16.gmra.mxu0 %v79
  %v177 = vpop.f32.mrf.mxu0
  %v178 = vadd.f32 0.0, %v177
  %v179 = vpop.f32.mrf.mxu0
  %v180 = vpop.f32.mrf.mxu0
  %v181 = vadd.f32 0.0, %v180
  %v182 = vpop.f32.mrf.mxu0
  %183 = vmatprep.mubr.bf16.mxu0 0
  %184 = vmatmul.mubr.bf16.gmra.mxu0 %v80
  %v185 = vpop.f32.mrf.mxu0
  %v186 = vadd.f32 0.0, %v185
  %v187 = vpop.f32.mrf.mxu0
  %v188 = vpop.f32.mrf.mxu0
  %v189 = vadd.f32 0.0, %v188
  %v190 = vpop.f32.mrf.mxu0
  %191 = vmatprep.mubr.bf16.mxu0 0
  %192 = vmatmul.mubr.bf16.gmra.mxu0 %v81
  %v193 = vpop.f32.mrf.mxu0
  %v194 = vadd.f32 0.0, %v193
  %v195 = vpop.f32.mrf.mxu0
  %v196 = vpop.f32.mrf.mxu0
  %v197 = vadd.f32 0.0, %v196
  %v198 = vpop.f32.mrf.mxu0
  %199 = vmatprep.mubr.bf16.mxu0 0
  %200 = vmatmul.mubr.bf16.gmra.mxu0 %v82
  %v201 = vpop.f32.mrf.mxu0
  %v202 = vadd.f32 0.0, %v201
  %v203 = vpop.f32.mrf.mxu0
  %v204 = vpop.f32.mrf.mxu0
  %v205 = vadd.f32 0.0, %v204
  %v206 = vpop.f32.mrf.mxu0
  %207 = vmatprep.mubr.bf16.mxu0 0
  %208 = vmatmul.mubr.bf16.gmra.mxu0 %v83
  %v209 = vpop.f32.mrf.mxu0
  %v210 = vadd.f32 0.0, %v209
  %v211 = vpop.f32.mrf.mxu0
  %v212 = vpop.f32.mrf.mxu0
  %v213 = vadd.f32 0.0, %v212
  %v214 = vpop.f32.mrf.mxu0
  %215 = vmatprep.mubr.bf16.mxu0 0
  %216 = vmatmul.mubr.bf16.gmra.mxu0 %v84
  %v217 = vpop.f32.mrf.mxu0
  %v218 = vadd.f32 0.0, %v217
  %v219 = vpop.f32.mrf.mxu0
  %v220 = vpop.f32.mrf.mxu0
  %v221 = vadd.f32 0.0, %v220
  %v222 = vpop.f32.mrf.mxu0
  %223 = vmatprep.mubr.bf16.mxu0 0
  %224 = vmatmul.mubr.bf16.gmra.mxu0 %v85
  %v225 = vpop.f32.mrf.mxu0
  %v226 = vadd.f32 0.0, %v225
  %v227 = vpop.f32.mrf.mxu0
  %v228 = vpop.f32.mrf.mxu0
  %v229 = vadd.f32 0.0, %v228
  %v230 = vpop.f32.mrf.mxu0
  %231 = vmatprep.mubr.bf16.mxu0 0
  %232 = vmatmul.mubr.bf16.gmra.mxu0 %v86
  %v233 = vpop.f32.mrf.mxu0
  %v234 = vadd.f32 0.0, %v233
  %v235 = vpop.f32.mrf.mxu0
  %v236 = vpop.f32.mrf.mxu0
  %v237 = vadd.f32 0.0, %v236
  %v238 = vpop.f32.mrf.mxu0
  %239 = vdwg.mxu0
  %v240 = vld [vmem:[%s2] sm:$0xff]
  %v241 = vld [vmem:[%s2 + $0x8] sm:$0xff]
  %v242 = vld [vmem:[%s2 + $0x10] sm:$0xff]
  %v243 = vld [vmem:[%s2 + $0x18] sm:$0xff]
  %v244 = vld [vmem:[%s2 + $0x20] sm:$0xff]
  %v245 = vld [vmem:[%s2 + $0x28] sm:$0xff]
  %v246 = vld [vmem:[%s2 + $0x30] sm:$0xff]
  %v247 = vld [vmem:[%s2 + $0x38] sm:$0xff]
  %v248 = vld [vmem:[%s2 + $0x40] sm:$0xff]
  %v249 = vld [vmem:[%s2 + $0x48] sm:$0xff]
  %v250 = vld [vmem:[%s2 + $0x50] sm:$0xff]
  %v251 = vld [vmem:[%s2 + $0x58] sm:$0xff]
  %v252 = vld [vmem:[%s2 + $0x60] sm:$0xff]
  %v253 = vld [vmem:[%s2 + $0x68] sm:$0xff]
  %v254 = vld [vmem:[%s2 + $0x70] sm:$0xff]
  %v255 = vld [vmem:[%s2 + $0x78] sm:$0xff]
  %257 = vset.pattern.permute.xlu0 0
  %258 = vperm.xlu0 %257, %v240
  %v259 = vpop.permute.xlu0 %258
  %262 = vset.pattern.permute.xlu0 0
  %263 = vperm.xlu0 %262, %v241
  %v264 = vpop.permute.xlu0 %263
  %267 = vset.pattern.permute.xlu0 0
  %268 = vperm.xlu0 %267, %v242
  %v269 = vpop.permute.xlu0 %268
  %272 = vset.pattern.permute.xlu0 0
  %273 = vperm.xlu0 %272, %v243
  %v274 = vpop.permute.xlu0 %273
  %277 = vset.pattern.permute.xlu0 0
  %278 = vperm.xlu0 %277, %v244
  %v279 = vpop.permute.xlu0 %278
  %282 = vset.pattern.permute.xlu0 0
  %283 = vperm.xlu0 %282, %v245
  %v284 = vpop.permute.xlu0 %283
  %287 = vset.pattern.permute.xlu0 0
  %288 = vperm.xlu0 %287, %v246
  %v289 = vpop.permute.xlu0 %288
  %292 = vset.pattern.permute.xlu0 0
  %293 = vperm.xlu0 %292, %v247
  %v294 = vpop.permute.xlu0 %293
  %297 = vset.pattern.permute.xlu0 0
  %298 = vperm.xlu0 %297, %v248
  %v299 = vpop.permute.xlu0 %298
  %302 = vset.pattern.permute.xlu0 0
  %303 = vperm.xlu0 %302, %v249
  %v304 = vpop.permute.xlu0 %303
  %307 = vset.pattern.permute.xlu0 0
  %308 = vperm.xlu0 %307, %v250
  %v309 = vpop.permute.xlu0 %308
  %312 = vset.pattern.permute.xlu0 0
  %313 = vperm.xlu0 %312, %v251
  %v314 = vpop.permute.xlu0 %313
  %317 = vset.pattern.permute.xlu0 0
  %318 = vperm.xlu0 %317, %v252
  %v319 = vpop.permute.xlu0 %318
  %322 = vset.pattern.permute.xlu0 0
  %323 = vperm.xlu0 %322, %v253
  %v324 = vpop.permute.xlu0 %323
  %327 = vset.pattern.permute.xlu0 0
  %328 = vperm.xlu0 %327, %v254
  %v329 = vpop.permute.xlu0 %328
  %332 = vset.pattern.permute.xlu0 0
  %333 = vperm.xlu0 %332, %v255
  %v334 = vpop.permute.xlu0 %333
  %v336 = vmul.f32 %v178, %v259
  %v337 = vmul.f32 %v181, %v264
  %v338 = vmul.f32 %v186, %v269
  %v339 = vmul.f32 %v189, %v274
  %v340 = vmul.f32 %v194, %v279
  %v341 = vmul.f32 %v197, %v284
  %v342 = vmul.f32 %v202, %v289
  %v343 = vmul.f32 %v205, %v294
  %v344 = vmul.f32 %v210, %v299
  %v345 = vmul.f32 %v213, %v304
  %v346 = vmul.f32 %v218, %v309
  %v347 = vmul.f32 %v221, %v314
  %v348 = vmul.f32 %v226, %v319
  %v349 = vmul.f32 %v229, %v324
  %v350 = vmul.f32 %v234, %v329
  %v351 = vmul.f32 %v237, %v334
  %v352 = vpack.c.bf16 %v337, %v336
  %v353 = vpack.c.bf16 %v339, %v338
  %v354 = vpack.c.bf16 %v341, %v340
  %v355 = vpack.c.bf16 %v343, %v342
  %v356 = vpack.c.bf16 %v345, %v344
  %v357 = vpack.c.bf16 %v347, %v346
  %v358 = vpack.c.bf16 %v349, %v348
  %v359 = vpack.c.bf16 %v351, %v350
  %v368 = vunpack.c.l.b16 %v352
  %v369 = vunpack.c.h.b16 %v352
  %v370 = vunpack.c.l.b16 %v353
  %v371 = vunpack.c.h.b16 %v353
  %v372 = vunpack.c.l.b16 %v354
  %v373 = vunpack.c.h.b16 %v354
  %v374 = vunpack.c.l.b16 %v355
  %v375 = vunpack.c.h.b16 %v355
  %v376 = vunpack.c.l.b16 %v356
  %v377 = vunpack.c.h.b16 %v356
  %v378 = vunpack.c.l.b16 %v357
  %v379 = vunpack.c.h.b16 %v357
  %v380 = vunpack.c.l.b16 %v358
  %v381 = vunpack.c.h.b16 %v358
  %v382 = vunpack.c.l.b16 %v359
  %v383 = vunpack.c.h.b16 %v359
  %v384 = vpack.c.b16 %v368, %v368
  %v385 = vpack.c.b16 %v369, %v369
  %v386 = vpack.c.b16 %v370, %v370
  %v387 = vpack.c.b16 %v371, %v371
  %v388 = vpack.c.b16 %v372, %v372
  %v389 = vpack.c.b16 %v373, %v373
  %v390 = vpack.c.b16 %v374, %v374
  %v391 = vpack.c.b16 %v375, %v375
  %v392 = vpack.c.b16 %v376, %v376
  %v393 = vpack.c.b16 %v377, %v377
  %v394 = vpack.c.b16 %v378, %v378
  %v395 = vpack.c.b16 %v379, %v379
  %v396 = vpack.c.b16 %v380, %v380
  %v397 = vpack.c.b16 %v381, %v381
  %v398 = vpack.c.b16 %v382, %v382
  %v399 = vpack.c.b16 %v383, %v383
  %416 = vst [vmem:[%s3] sm:$0xf] %v384
  %417 = vst [vmem:[%s3 + $0x4] sm:$0xf] %v385
  %418 = vst [vmem:[%s3 + $0x8] sm:$0xf] %v386
  %419 = vst [vmem:[%s3 + $0xc] sm:$0xf] %v387
  %420 = vst [vmem:[%s3 + $0x10] sm:$0xf] %v388
  %421 = vst [vmem:[%s3 + $0x14] sm:$0xf] %v389
  %422 = vst [vmem:[%s3 + $0x18] sm:$0xf] %v390
  %423 = vst [vmem:[%s3 + $0x1c] sm:$0xf] %v391
  %424 = vst [vmem:[%s3 + $0x20] sm:$0xf] %v392
  %425 = vst [vmem:[%s3 + $0x24] sm:$0xf] %v393
  %426 = vst [vmem:[%s3 + $0x28] sm:$0xf] %v394
  %427 = vst [vmem:[%s3 + $0x2c] sm:$0xf] %v395
  %428 = vst [vmem:[%s3 + $0x30] sm:$0xf] %v396
  %429 = vst [vmem:[%s3 + $0x34] sm:$0xf] %v397
  %430 = vst [vmem:[%s3 + $0x38] sm:$0xf] %v398
  %431 = vst [vmem:[%s3 + $0x3c] sm:$0xf] %v399
  // Predicated region
  $region14: #{gcn_forward.5} parent=0 // pred_check
    _
  $region15: #{gcn_forward.5} parent=0 // pred_check_branch
    %433 = sbr.rel (0) target = $region17
  $region16: #{gcn_forward.5} parent=0 // pred_region
    _
  $region17: #{gcn_forward.5} parent=0 // pred_fallthru
    _
  // Predicated region
  $region18: #{gcn_forward.5} parent=0 // pred_check
    _
  $region19: #{gcn_forward.5} parent=0 // pred_check_branch
    %435 = sbr.rel (0) target = $region21
  $region20: #{gcn_forward.5} parent=0 // pred_region
    _
  $region21: #{gcn_forward.5} parent=0 // pred_fallthru
    _

// kernel: gcn_forward.6
$region0: #{gcn_forward.6}
  #allocation0 [shape = 'u32[]', space=smem, size = 0x4, offset = 0x4, fixed_abs, tag = 'smem constant byte address 0x4 - core index']
  #allocation1 [shape = 'u32[144,128]{1,0:T(1,128)}', space=vmem, size = 0x12000, scoped, tag = 'internal scratch']
  #allocation2 [shape = 'f32[128,128]{1,0:T(8,128)}', space=vmem, size = 0x10000, scoped, tag = 'scratch operand']
  %s0 = inlined_call_operand.vmem [shape: bf16[128,128], index: 0, kind: input, shape index: {}]
  %s1 = inlined_call_operand.vmem [shape: bf16[128,128], index: 1, kind: input, shape index: {}]
  %s2 = inlined_call_operand.vmem [shape: f32[128,1], index: 2, kind: input, shape index: {}]
  %s3 = inlined_call_operand.vmem [shape: f32[1,128], index: 3, kind: input, shape index: {}]
  %s4 = inlined_call_operand.vmem [shape: bf16[128,128], index: 4, kind: output, shape index: {}]
  %s5 = sld [smem:[#allocation0]]
  $region34: #{gcn_forward.6} parent=0
    _
  %s7 = ssub.s32 1, %s5
  %s8 = scalar_select 0, %s7, %s5
  // Predicated region
  $region2: #{gcn_forward.6} parent=0 // pred_check
    _
  $region3: #{gcn_forward.6} parent=0 // pred_check_branch
    %10 = sbr.rel (0) target = $region5
  $region4: #{gcn_forward.6} parent=0 // pred_region
    _
  $region5: #{gcn_forward.6} parent=0 // pred_fallthru
    _
  // Predicated region
  $region6: #{gcn_forward.6} parent=0 // pred_check
    _
  $region7: #{gcn_forward.6} parent=0 // pred_check_branch
    %12 = sbr.rel (0) target = $region9
  $region8: #{gcn_forward.6} parent=0 // pred_region
    _
  $region9: #{gcn_forward.6} parent=0 // pred_fallthru
    _
  // Predicated region
  $region10: #{gcn_forward.6} parent=0 // pred_check
    _
  $region11: #{gcn_forward.6} parent=0 // pred_check_branch
    %14 = sbr.rel (0) target = $region13
  $region12: #{gcn_forward.6} parent=0 // pred_region
    _
  $region13: #{gcn_forward.6} parent=0 // pred_fallthru
    _
  // Predicated region
  $region14: #{gcn_forward.6} parent=0 // pred_check
    _
  $region15: #{gcn_forward.6} parent=0 // pred_check_branch
    %16 = sbr.rel (0) target = $region17
  $region16: #{gcn_forward.6} parent=0 // pred_region
    _
  $region17: #{gcn_forward.6} parent=0 // pred_fallthru
    _
  %p18 = scmp.eq.s32.totalorder 0, 0
  // Predicated region
  $region18: #{gcn_forward.6} parent=0 // pred_check
    %p19 = pneg %p18
  $region19: #{gcn_forward.6} parent=0 // pred_check_branch
    %21 = sbr.rel (%p19) target = $region21
  $region20: #{gcn_forward.6} parent=0 // pred_region
    %22 = vst [vmem:[#allocation2] sm:$0xff] 0.0
    %23 = vst [vmem:[#allocation2 + $0x8] sm:$0xff] 0.0
    %24 = vst [vmem:[#allocation2 + $0x10] sm:$0xff] 0.0
    %25 = vst [vmem:[#allocation2 + $0x18] sm:$0xff] 0.0
    %26 = vst [vmem:[#allocation2 + $0x20] sm:$0xff] 0.0
    %27 = vst [vmem:[#allocation2 + $0x28] sm:$0xff] 0.0
    %28 = vst [vmem:[#allocation2 + $0x30] sm:$0xff] 0.0
    %29 = vst [vmem:[#allocation2 + $0x38] sm:$0xff] 0.0
    %30 = vst [vmem:[#allocation2 + $0x40] sm:$0xff] 0.0
    %31 = vst [vmem:[#allocation2 + $0x48] sm:$0xff] 0.0
    %32 = vst [vmem:[#allocation2 + $0x50] sm:$0xff] 0.0
    %33 = vst [vmem:[#allocation2 + $0x58] sm:$0xff] 0.0
    %34 = vst [vmem:[#allocation2 + $0x60] sm:$0xff] 0.0
    %35 = vst [vmem:[#allocation2 + $0x68] sm:$0xff] 0.0
    %36 = vst [vmem:[#allocation2 + $0x70] sm:$0xff] 0.0
    %37 = vst [vmem:[#allocation2 + $0x78] sm:$0xff] 0.0
  $region21: #{gcn_forward.6} parent=0 // pred_fallthru
    _
  %v38 = vld [vmem:[#allocation2] sm:$0xff]
  %v39 = vld [vmem:[#allocation2 + $0x8] sm:$0xff]
  %v40 = vld [vmem:[#allocation2 + $0x10] sm:$0xff]
  %v41 = vld [vmem:[#allocation2 + $0x18] sm:$0xff]
  %v42 = vld [vmem:[#allocation2 + $0x20] sm:$0xff]
  %v43 = vld [vmem:[#allocation2 + $0x28] sm:$0xff]
  %v44 = vld [vmem:[#allocation2 + $0x30] sm:$0xff]
  %v45 = vld [vmem:[#allocation2 + $0x38] sm:$0xff]
  %v46 = vld [vmem:[#allocation2 + $0x40] sm:$0xff]
  %v47 = vld [vmem:[#allocation2 + $0x48] sm:$0xff]
  %v48 = vld [vmem:[#allocation2 + $0x50] sm:$0xff]
  %v49 = vld [vmem:[#allocation2 + $0x58] sm:$0xff]
  %v50 = vld [vmem:[#allocation2 + $0x60] sm:$0xff]
  %v51 = vld [vmem:[#allocation2 + $0x68] sm:$0xff]
  %v52 = vld [vmem:[#allocation2 + $0x70] sm:$0xff]
  %v53 = vld [vmem:[#allocation2 + $0x78] sm:$0xff]
  %v54 = vld [vmem:[%s0] sm:$0xf]
  %v55 = vld [vmem:[%s0 + $0x4] sm:$0xf]
  %v56 = vld [vmem:[%s0 + $0x8] sm:$0xf]
  %v57 = vld [vmem:[%s0 + $0xc] sm:$0xf]
  %v58 = vld [vmem:[%s0 + $0x10] sm:$0xf]
  %v59 = vld [vmem:[%s0 + $0x14] sm:$0xf]
  %v60 = vld [vmem:[%s0 + $0x18] sm:$0xf]
  %v61 = vld [vmem:[%s0 + $0x1c] sm:$0xf]
  %v62 = vld [vmem:[%s0 + $0x20] sm:$0xf]
  %v63 = vld [vmem:[%s0 + $0x24] sm:$0xf]
  %v64 = vld [vmem:[%s0 + $0x28] sm:$0xf]
  %v65 = vld [vmem:[%s0 + $0x2c] sm:$0xf]
  %v66 = vld [vmem:[%s0 + $0x30] sm:$0xf]
  %v67 = vld [vmem:[%s0 + $0x34] sm:$0xf]
  %v68 = vld [vmem:[%s0 + $0x38] sm:$0xf]
  %v69 = vld [vmem:[%s0 + $0x3c] sm:$0xf]
  %v70 = vld [vmem:[%s1] sm:$0xf]
  %v71 = vld [vmem:[%s1 + $0x4] sm:$0xf]
  %v72 = vld [vmem:[%s1 + $0x8] sm:$0xf]
  %v73 = vld [vmem:[%s1 + $0xc] sm:$0xf]
  %v74 = vld [vmem:[%s1 + $0x10] sm:$0xf]
  %v75 = vld [vmem:[%s1 + $0x14] sm:$0xf]
  %v76 = vld [vmem:[%s1 + $0x18] sm:$0xf]
  %v77 = vld [vmem:[%s1 + $0x1c] sm:$0xf]
  %v78 = vld [vmem:[%s1 + $0x20] sm:$0xf]
  %v79 = vld [vmem:[%s1 + $0x24] sm:$0xf]
  %v80 = vld [vmem:[%s1 + $0x28] sm:$0xf]
  %v81 = vld [vmem:[%s1 + $0x2c] sm:$0xf]
  %v82 = vld [vmem:[%s1 + $0x30] sm:$0xf]
  %v83 = vld [vmem:[%s1 + $0x34] sm:$0xf]
  %v84 = vld [vmem:[%s1 + $0x38] sm:$0xf]
  %v85 = vld [vmem:[%s1 + $0x3c] sm:$0xf]
  %v102 = vunpack.c.l.b16 %v54
  %v103 = vunpack.c.l.b16 %v55
  %v104 = vunpack.c.l.b16 %v56
  %v105 = vunpack.c.l.b16 %v57
  %v106 = vunpack.c.l.b16 %v58
  %v107 = vunpack.c.l.b16 %v59
  %v108 = vunpack.c.l.b16 %v60
  %v109 = vunpack.c.l.b16 %v61
  %v110 = vunpack.c.l.b16 %v62
  %v111 = vunpack.c.l.b16 %v63
  %v112 = vunpack.c.l.b16 %v64
  %v113 = vunpack.c.l.b16 %v65
  %v114 = vunpack.c.l.b16 %v66
  %v115 = vunpack.c.l.b16 %v67
  %v116 = vunpack.c.l.b16 %v68
  %v117 = vunpack.c.l.b16 %v69
  %v118 = vpack.c.b16 %v103, %v102
  %v119 = vpack.c.b16 %v105, %v104
  %v120 = vpack.c.b16 %v107, %v106
  %v121 = vpack.c.b16 %v109, %v108
  %v122 = vpack.c.b16 %v111, %v110
  %v123 = vpack.c.b16 %v113, %v112
  %v124 = vpack.c.b16 %v115, %v114
  %v125 = vpack.c.b16 %v117, %v116
  %v150 = vunpack.c.l.b16 %v70
  %v151 = vunpack.c.l.b16 %v71
  %v152 = vunpack.c.l.b16 %v72
  %v153 = vunpack.c.l.b16 %v73
  %v154 = vunpack.c.l.b16 %v74
  %v155 = vunpack.c.l.b16 %v75
  %v156 = vunpack.c.l.b16 %v76
  %v157 = vunpack.c.l.b16 %v77
  %v158 = vunpack.c.l.b16 %v78
  %v159 = vunpack.c.l.b16 %v79
  %v160 = vunpack.c.l.b16 %v80
  %v161 = vunpack.c.l.b16 %v81
  %v162 = vunpack.c.l.b16 %v82
  %v163 = vunpack.c.l.b16 %v83
  %v164 = vunpack.c.l.b16 %v84
  %v165 = vunpack.c.l.b16 %v85
  %v166 = vpack.c.b16 %v151, %v150
  %v167 = vpack.c.b16 %v153, %v152
  %v168 = vpack.c.b16 %v155, %v154
  %v169 = vpack.c.b16 %v157, %v156
  %v170 = vpack.c.b16 %v159, %v158
  %v171 = vpack.c.b16 %v161, %v160
  %v172 = vpack.c.b16 %v163, %v162
  %v173 = vpack.c.b16 %v165, %v164
  %182 = vmatprep.subr.bf16.mxu0 0
  %183 = vmatpush1.bf16.msra.mxu0 %v173
  %184 = vmatprep.subr.bf16.mxu0 0
  %185 = vmatpush1.bf16.msra.mxu0 %v172
  %186 = vmatprep.subr.bf16.mxu0 0
  %187 = vmatpush1.bf16.msra.mxu0 %v171
  %188 = vmatprep.subr.bf16.mxu0 0
  %189 = vmatpush1.bf16.msra.mxu0 %v170
  %190 = vmatprep.subr.bf16.mxu0 0
  %191 = vmatpush1.bf16.msra.mxu0 %v169
  %192 = vmatprep.subr.bf16.mxu0 0
  %193 = vmatpush1.bf16.msra.mxu0 %v168
  %194 = vmatprep.subr.bf16.mxu0 0
  %195 = vmatpush1.bf16.msra.mxu0 %v167
  %196 = vmatprep.subr.bf16.mxu0 0
  %197 = vmatpush1.bf16.msra.mxu0 %v166
  %198 = vmatprep.subr.bf16.mxu0 0
  %199 = vmatpush2.bf16.msra.mxu0 0
  %200 = vmatprep.subr.bf16.mxu0 0
  %201 = vmatpush2.bf16.msra.mxu0 0
  %202 = vmatprep.subr.bf16.mxu0 0
  %203 = vmatpush2.bf16.msra.mxu0 0
  %204 = vmatprep.subr.bf16.mxu0 0
  %205 = vmatpush2.bf16.msra.mxu0 0
  %206 = vmatprep.subr.bf16.mxu0 0
  %207 = vmatpush2.bf16.msra.mxu0 0
  %208 = vmatprep.subr.bf16.mxu0 0
  %209 = vmatpush2.bf16.msra.mxu0 0
  %210 = vmatprep.subr.bf16.mxu0 0
  %211 = vmatpush2.bf16.msra.mxu0 0
  %212 = vmatprep.subr.bf16.mxu0 0
  %213 = vmatpush2.bf16.msra.mxu0 0
  %214 = vmatprep.mubr.bf16.mxu0 0
  %215 = vmatmul.mubr.bf16.gmra.mxu0 %v118
  %v216 = vpop.f32.mrf.mxu0
  %v217 = vadd.f32 0.0, %v216
  %v218 = vpop.f32.mrf.mxu0
  %v219 = vpop.f32.mrf.mxu0
  %v220 = vadd.f32 0.0, %v219
  %v221 = vpop.f32.mrf.mxu0
  %222 = vmatprep.mubr.bf16.mxu0 0
  %223 = vmatmul.mubr.bf16.gmra.mxu0 %v119
  %v224 = vpop.f32.mrf.mxu0
  %v225 = vadd.f32 0.0, %v224
  %v226 = vpop.f32.mrf.mxu0
  %v227 = vpop.f32.mrf.mxu0
  %v228 = vadd.f32 0.0, %v227
  %v229 = vpop.f32.mrf.mxu0
  %230 = vmatprep.mubr.bf16.mxu0 0
  %231 = vmatmul.mubr.bf16.gmra.mxu0 %v120
  %v232 = vpop.f32.mrf.mxu0
  %v233 = vadd.f32 0.0, %v232
  %v234 = vpop.f32.mrf.mxu0
  %v235 = vpop.f32.mrf.mxu0
  %v236 = vadd.f32 0.0, %v235
  %v237 = vpop.f32.mrf.mxu0
  %238 = vmatprep.mubr.bf16.mxu0 0
  %239 = vmatmul.mubr.bf16.gmra.mxu0 %v121
  %v240 = vpop.f32.mrf.mxu0
  %v241 = vadd.f32 0.0, %v240
  %v242 = vpop.f32.mrf.mxu0
  %v243 = vpop.f32.mrf.mxu0
  %v244 = vadd.f32 0.0, %v243
  %v245 = vpop.f32.mrf.mxu0
  %246 = vmatprep.mubr.bf16.mxu0 0
  %247 = vmatmul.mubr.bf16.gmra.mxu0 %v122
  %v248 = vpop.f32.mrf.mxu0
  %v249 = vadd.f32 0.0, %v248
  %v250 = vpop.f32.mrf.mxu0
  %v251 = vpop.f32.mrf.mxu0
  %v252 = vadd.f32 0.0, %v251
  %v253 = vpop.f32.mrf.mxu0
  %254 = vmatprep.mubr.bf16.mxu0 0
  %255 = vmatmul.mubr.bf16.gmra.mxu0 %v123
  %v256 = vpop.f32.mrf.mxu0
  %v257 = vadd.f32 0.0, %v256
  %v258 = vpop.f32.mrf.mxu0
  %v259 = vpop.f32.mrf.mxu0
  %v260 = vadd.f32 0.0, %v259
  %v261 = vpop.f32.mrf.mxu0
  %262 = vmatprep.mubr.bf16.mxu0 0
  %263 = vmatmul.mubr.bf16.gmra.mxu0 %v124
  %v264 = vpop.f32.mrf.mxu0
  %v265 = vadd.f32 0.0, %v264
  %v266 = vpop.f32.mrf.mxu0
  %v267 = vpop.f32.mrf.mxu0
  %v268 = vadd.f32 0.0, %v267
  %v269 = vpop.f32.mrf.mxu0
  %270 = vmatprep.mubr.bf16.mxu0 0
  %271 = vmatmul.mubr.bf16.gmra.mxu0 %v125
  %v272 = vpop.f32.mrf.mxu0
  %v273 = vadd.f32 0.0, %v272
  %v274 = vpop.f32.mrf.mxu0
  %v275 = vpop.f32.mrf.mxu0
  %v276 = vadd.f32 0.0, %v275
  %v277 = vpop.f32.mrf.mxu0
  %278 = vdwg.mxu0
  %v279 = vadd.f32 %v38, %v217
  %v280 = vadd.f32 %v39, %v220
  %v281 = vadd.f32 %v40, %v225
  %v282 = vadd.f32 %v41, %v228
  %v283 = vadd.f32 %v42, %v233
  %v284 = vadd.f32 %v43, %v236
  %v285 = vadd.f32 %v44, %v241
  %v286 = vadd.f32 %v45, %v244
  %v287 = vadd.f32 %v46, %v249
  %v288 = vadd.f32 %v47, %v252
  %v289 = vadd.f32 %v48, %v257
  %v290 = vadd.f32 %v49, %v260
  %v291 = vadd.f32 %v50, %v265
  %v292 = vadd.f32 %v51, %v268
  %v293 = vadd.f32 %v52, %v273
  %v294 = vadd.f32 %v53, %v276
  %295 = vst [vmem:[#allocation2] sm:$0xff] %v279
  %296 = vst [vmem:[#allocation2 + $0x8] sm:$0xff] %v280
  %297 = vst [vmem:[#allocation2 + $0x10] sm:$0xff] %v281
  %298 = vst [vmem:[#allocation2 + $0x18] sm:$0xff] %v282
  %299 = vst [vmem:[#allocation2 + $0x20] sm:$0xff] %v283
  %300 = vst [vmem:[#allocation2 + $0x28] sm:$0xff] %v284
  %301 = vst [vmem:[#allocation2 + $0x30] sm:$0xff] %v285
  %302 = vst [vmem:[#allocation2 + $0x38] sm:$0xff] %v286
  %303 = vst [vmem:[#allocation2 + $0x40] sm:$0xff] %v287
  %304 = vst [vmem:[#allocation2 + $0x48] sm:$0xff] %v288
  %305 = vst [vmem:[#allocation2 + $0x50] sm:$0xff] %v289
  %306 = vst [vmem:[#allocation2 + $0x58] sm:$0xff] %v290
  %307 = vst [vmem:[#allocation2 + $0x60] sm:$0xff] %v291
  %308 = vst [vmem:[#allocation2 + $0x68] sm:$0xff] %v292
  %309 = vst [vmem:[#allocation2 + $0x70] sm:$0xff] %v293
  %310 = vst [vmem:[#allocation2 + $0x78] sm:$0xff] %v294
  // Predicated region
  $region22: #{gcn_forward.6} parent=0 // pred_check
    %p311 = pneg %p18
  $region23: #{gcn_forward.6} parent=0 // pred_check_branch
    %313 = sbr.rel (%p311) target = $region25
  $region24: #{gcn_forward.6} parent=0 // pred_region
    %v314 = vld [vmem:[%s2] sm:$0xff]
    %v315 = vld [vmem:[%s2 + $0x8] sm:$0xff]
    %v316 = vld [vmem:[%s2 + $0x10] sm:$0xff]
    %v317 = vld [vmem:[%s2 + $0x18] sm:$0xff]
    %v318 = vld [vmem:[%s2 + $0x20] sm:$0xff]
    %v319 = vld [vmem:[%s2 + $0x28] sm:$0xff]
    %v320 = vld [vmem:[%s2 + $0x30] sm:$0xff]
    %v321 = vld [vmem:[%s2 + $0x38] sm:$0xff]
    %v322 = vld [vmem:[%s2 + $0x40] sm:$0xff]
    %v323 = vld [vmem:[%s2 + $0x48] sm:$0xff]
    %v324 = vld [vmem:[%s2 + $0x50] sm:$0xff]
    %v325 = vld [vmem:[%s2 + $0x58] sm:$0xff]
    %v326 = vld [vmem:[%s2 + $0x60] sm:$0xff]
    %v327 = vld [vmem:[%s2 + $0x68] sm:$0xff]
    %v328 = vld [vmem:[%s2 + $0x70] sm:$0xff]
    %v329 = vld [vmem:[%s2 + $0x78] sm:$0xff]
    %v330 = vld [vmem:[#allocation2] sm:$0xff]
    %v331 = vld [vmem:[#allocation2 + $0x8] sm:$0xff]
    %v332 = vld [vmem:[#allocation2 + $0x10] sm:$0xff]
    %v333 = vld [vmem:[#allocation2 + $0x18] sm:$0xff]
    %v334 = vld [vmem:[#allocation2 + $0x20] sm:$0xff]
    %v335 = vld [vmem:[#allocation2 + $0x28] sm:$0xff]
    %v336 = vld [vmem:[#allocation2 + $0x30] sm:$0xff]
    %v337 = vld [vmem:[#allocation2 + $0x38] sm:$0xff]
    %v338 = vld [vmem:[#allocation2 + $0x40] sm:$0xff]
    %v339 = vld [vmem:[#allocation2 + $0x48] sm:$0xff]
    %v340 = vld [vmem:[#allocation2 + $0x50] sm:$0xff]
    %v341 = vld [vmem:[#allocation2 + $0x58] sm:$0xff]
    %v342 = vld [vmem:[#allocation2 + $0x60] sm:$0xff]
    %v343 = vld [vmem:[#allocation2 + $0x68] sm:$0xff]
    %v344 = vld [vmem:[#allocation2 + $0x70] sm:$0xff]
    %v345 = vld [vmem:[#allocation2 + $0x78] sm:$0xff]
    %347 = vset.pattern.permute.xlu0 0
    %348 = vperm.xlu0 %347, %v314
    %v349 = vpop.permute.xlu0 %348
    %352 = vset.pattern.permute.xlu0 0
    %353 = vperm.xlu0 %352, %v315
    %v354 = vpop.permute.xlu0 %353
    %357 = vset.pattern.permute.xlu0 0
    %358 = vperm.xlu0 %357, %v316
    %v359 = vpop.permute.xlu0 %358
    %362 = vset.pattern.permute.xlu0 0
    %363 = vperm.xlu0 %362, %v317
    %v364 = vpop.permute.xlu0 %363
    %367 = vset.pattern.permute.xlu0 0
    %368 = vperm.xlu0 %367, %v318
    %v369 = vpop.permute.xlu0 %368
    %372 = vset.pattern.permute.xlu0 0
    %373 = vperm.xlu0 %372, %v319
    %v374 = vpop.permute.xlu0 %373
    %377 = vset.pattern.permute.xlu0 0
    %378 = vperm.xlu0 %377, %v320
    %v379 = vpop.permute.xlu0 %378
    %382 = vset.pattern.permute.xlu0 0
    %383 = vperm.xlu0 %382, %v321
    %v384 = vpop.permute.xlu0 %383
    %387 = vset.pattern.permute.xlu0 0
    %388 = vperm.xlu0 %387, %v322
    %v389 = vpop.permute.xlu0 %388
    %392 = vset.pattern.permute.xlu0 0
    %393 = vperm.xlu0 %392, %v323
    %v394 = vpop.permute.xlu0 %393
    %397 = vset.pattern.permute.xlu0 0
    %398 = vperm.xlu0 %397, %v324
    %v399 = vpop.permute.xlu0 %398
    %402 = vset.pattern.permute.xlu0 0
    %403 = vperm.xlu0 %402, %v325
    %v404 = vpop.permute.xlu0 %403
    %407 = vset.pattern.permute.xlu0 0
    %408 = vperm.xlu0 %407, %v326
    %v409 = vpop.permute.xlu0 %408
    %412 = vset.pattern.permute.xlu0 0
    %413 = vperm.xlu0 %412, %v327
    %v414 = vpop.permute.xlu0 %413
    %417 = vset.pattern.permute.xlu0 0
    %418 = vperm.xlu0 %417, %v328
    %v419 = vpop.permute.xlu0 %418
    %422 = vset.pattern.permute.xlu0 0
    %423 = vperm.xlu0 %422, %v329
    %v424 = vpop.permute.xlu0 %423
    %v426 = vmul.f32 %v349, %v330
    %v427 = vmul.f32 %v354, %v331
    %v428 = vmul.f32 %v359, %v332
    %v429 = vmul.f32 %v364, %v333
    %v430 = vmul.f32 %v369, %v334
    %v431 = vmul.f32 %v374, %v335
    %v432 = vmul.f32 %v379, %v336
    %v433 = vmul.f32 %v384, %v337
    %v434 = vmul.f32 %v389, %v338
    %v435 = vmul.f32 %v394, %v339
    %v436 = vmul.f32 %v399, %v340
    %v437 = vmul.f32 %v404, %v341
    %v438 = vmul.f32 %v409, %v342
    %v439 = vmul.f32 %v414, %v343
    %v440 = vmul.f32 %v419, %v344
    %v441 = vmul.f32 %v424, %v345
    %v442 = vld [vmem:[%s3] sm:$0x1]
    %v444 = vlaneseq
    %v445 = vshrl.u32 %v444, 7
    %v446 = vsub.s32 0, %v445
    %v447 = vrot.slane %v442, %v446
    %v449 = vadd.f32 %v426, %v447
    %v450 = vadd.f32 %v427, %v447
    %v451 = vadd.f32 %v428, %v447
    %v452 = vadd.f32 %v429, %v447
    %v453 = vadd.f32 %v430, %v447
    %v454 = vadd.f32 %v431, %v447
    %v455 = vadd.f32 %v432, %v447
    %v456 = vadd.f32 %v433, %v447
    %v457 = vadd.f32 %v434, %v447
    %v458 = vadd.f32 %v435, %v447
    %v459 = vadd.f32 %v436, %v447
    %v460 = vadd.f32 %v437, %v447
    %v461 = vadd.f32 %v438, %v447
    %v462 = vadd.f32 %v439, %v447
    %v463 = vadd.f32 %v440, %v447
    %v464 = vadd.f32 %v441, %v447
    %v465 = vmax.f32 %v449, 0.0
    %v466 = vmax.f32 %v450, 0.0
    %v467 = vmax.f32 %v451, 0.0
    %v468 = vmax.f32 %v452, 0.0
    %v469 = vmax.f32 %v453, 0.0
    %v470 = vmax.f32 %v454, 0.0
    %v471 = vmax.f32 %v455, 0.0
    %v472 = vmax.f32 %v456, 0.0
    %v473 = vmax.f32 %v457, 0.0
    %v474 = vmax.f32 %v458, 0.0
    %v475 = vmax.f32 %v459, 0.0
    %v476 = vmax.f32 %v460, 0.0
    %v477 = vmax.f32 %v461, 0.0
    %v478 = vmax.f32 %v462, 0.0
    %v479 = vmax.f32 %v463, 0.0
    %v480 = vmax.f32 %v464, 0.0
    %v481 = vpack.c.bf16 %v466, %v465
    %v482 = vpack.c.bf16 %v468, %v467
    %v483 = vpack.c.bf16 %v470, %v469
    %v484 = vpack.c.bf16 %v472, %v471
    %v485 = vpack.c.bf16 %v474, %v473
    %v486 = vpack.c.bf16 %v476, %v475
    %v487 = vpack.c.bf16 %v478, %v477
    %v488 = vpack.c.bf16 %v480, %v479
    %v497 = vunpack.c.l.b16 %v481
    %v498 = vunpack.c.h.b16 %v481
    %v499 = vunpack.c.l.b16 %v482
    %v500 = vunpack.c.h.b16 %v482
    %v501 = vunpack.c.l.b16 %v483
    %v502 = vunpack.c.h.b16 %v483
    %v503 = vunpack.c.l.b16 %v484
    %v504 = vunpack.c.h.b16 %v484
    %v505 = vunpack.c.l.b16 %v485
    %v506 = vunpack.c.h.b16 %v485
    %v507 = vunpack.c.l.b16 %v486
    %v508 = vunpack.c.h.b16 %v486
    %v509 = vunpack.c.l.b16 %v487
    %v510 = vunpack.c.h.b16 %v487
    %v511 = vunpack.c.l.b16 %v488
    %v512 = vunpack.c.h.b16 %v488
    %v513 = vpack.c.b16 %v497, %v497
    %v514 = vpack.c.b16 %v498, %v498
    %v515 = vpack.c.b16 %v499, %v499
    %v516 = vpack.c.b16 %v500, %v500
    %v517 = vpack.c.b16 %v501, %v501
    %v518 = vpack.c.b16 %v502, %v502
    %v519 = vpack.c.b16 %v503, %v503
    %v520 = vpack.c.b16 %v504, %v504
    %v521 = vpack.c.b16 %v505, %v505
    %v522 = vpack.c.b16 %v506, %v506
    %v523 = vpack.c.b16 %v507, %v507
    %v524 = vpack.c.b16 %v508, %v508
    %v525 = vpack.c.b16 %v509, %v509
    %v526 = vpack.c.b16 %v510, %v510
    %v527 = vpack.c.b16 %v511, %v511
    %v528 = vpack.c.b16 %v512, %v512
    %545 = vst [vmem:[%s4] sm:$0xf] %v513
    %546 = vst [vmem:[%s4 + $0x4] sm:$0xf] %v514
    %547 = vst [vmem:[%s4 + $0x8] sm:$0xf] %v515
    %548 = vst [vmem:[%s4 + $0xc] sm:$0xf] %v516
    %549 = vst [vmem:[%s4 + $0x10] sm:$0xf] %v517
    %550 = vst [vmem:[%s4 + $0x14] sm:$0xf] %v518
    %551 = vst [vmem:[%s4 + $0x18] sm:$0xf] %v519
    %552 = vst [vmem:[%s4 + $0x1c] sm:$0xf] %v520
    %553 = vst [vmem:[%s4 + $0x20] sm:$0xf] %v521
    %554 = vst [vmem:[%s4 + $0x24] sm:$0xf] %v522
    %555 = vst [vmem:[%s4 + $0x28] sm:$0xf] %v523
    %556 = vst [vmem:[%s4 + $0x2c] sm:$0xf] %v524
    %557 = vst [vmem:[%s4 + $0x30] sm:$0xf] %v525
    %558 = vst [vmem:[%s4 + $0x34] sm:$0xf] %v526
    %559 = vst [vmem:[%s4 + $0x38] sm:$0xf] %v527
    %560 = vst [vmem:[%s4 + $0x3c] sm:$0xf] %v528
  $region25: #{gcn_forward.6} parent=0 // pred_fallthru
    _
  // Predicated region
  $region26: #{gcn_forward.6} parent=0 // pred_check
    _
  $region27: #{gcn_forward.6} parent=0 // pred_check_branch
    %562 = sbr.rel (0) target = $region29
  $region28: #{gcn_forward.6} parent=0 // pred_region
    _
  $region29: #{gcn_forward.6} parent=0 // pred_fallthru
    _
  // Predicated region
  $region30: #{gcn_forward.6} parent=0 // pred_check
    _
  $region31: #{gcn_forward.6} parent=0 // pred_check_branch
    %564 = sbr.rel (0) target = $region33
  $region32: #{gcn_forward.6} parent=0 // pred_region
    _
  $region33: #{gcn_forward.6} parent=0 // pred_fallthru
    _

</llo_original>
